<compile_context>
chip_gen: v7x
topology: tpu7x:2x2x1
jax: 0.10.0
libtpu: 0.0.40
codegen_flags: <defaults>
</compile_context>

<pallas_src>
import jax
import jax.numpy as jnp
from jax.experimental import pallas as pl
from jax.experimental.pallas import tpu as pltpu

NEG_SLOPE = 0.01
BN_EPS = 1e-5
MULTIPLE = 4  # Bottleneck.multiple

# single-buffering for grid-invariant operands (weights / biases)
try:
    _SINGLE_BUFFER = pl.Buffered(1)
except Exception:  # pragma: no cover - older API
    _SINGLE_BUFFER = None


def _leaky(x):
    # cheaper than where(x > 0, x, a*x): drops the cmp+select pair
    return jnp.maximum(x, NEG_SLOPE * x)


def _bn_fold(gamma, beta, mean, var):
    scale = gamma / jnp.sqrt(var + BN_EPS)
    bias = beta - mean * scale
    return scale[None, :], bias[None, :]


# ---------------------------------------------------------------------------
# kernel
# ---------------------------------------------------------------------------
def _make_bottleneck_kernel(has_downsample):
    def kernel(x_ref,    # (Bt, H, W, Cin)        bf16
               w1d_ref,  # (Cin, [Cout+]Cmid)     bf16  [downsample | conv1]*BN
               w2_ref,   # (9*Cmid, Cmid)         bf16  conv2*BN, HWIO flattened
               w3_ref,   # (Cmid, Cout)           bf16  conv3*BN
               b1_ref,   # (1, Cmid)              f32
               b2_ref,   # (1, Cmid)              f32
               b3_ref,   # (1, Cout)              f32
               bd_ref,   # (1, Cout)              f32  (unused for identity)
               out_ref,  # (Bt, H, W, Cout)       f32
               pad_ref,  # (Bt, H+2, W+2, Cmid)   bf16 scratch (halo)
               patch_ref,  # (Bt*H*W, 9*Cmid)     bf16 scratch (im2col)
               ):
        Bt, H, W, Cin = x_ref.shape
        Cmid = b1_ref.shape[-1]
        Cout = b3_ref.shape[-1]
        M = Bt * H * W

        # ---- conv1 (1x1) [+ downsample 1x1]: one fused matmul --------------
        x2d = x_ref[...].reshape(M, Cin)                    # bf16, free merge
        y0 = jnp.dot(x2d, w1d_ref[...], preferred_element_type=jnp.float32)
        if has_downsample:
            # stage the projected residual in the output block -> frees the
            # M x Cout f32 xd temp across the whole 3x3 section
            out_ref[...] = (y0[:, :Cout] + bd_ref[...]).reshape(Bt, H, W, Cout)
            y1 = _leaky(y0[:, Cout:Cout + Cmid] + b1_ref[...])
        else:
            y1 = _leaky(y0 + b1_ref[...])

        # ---- conv2 (3x3, stride 1, pad 1): bf16 im2col + one deep matmul ----
        # zero only the border strips of the halo scratch (interior is fully
        # overwritten below); robust even with per-core scratch on megacore
        pad_ref[:, 0:1, :, :] = jnp.zeros((Bt, 1, W + 2, Cmid), jnp.bfloat16)
        pad_ref[:, H + 1:H + 2, :, :] = jnp.zeros((Bt, 1, W + 2, Cmid), jnp.bfloat16)
        pad_ref[:, :, 0:1, :] = jnp.zeros((Bt, H + 2, 1, Cmid), jnp.bfloat16)
        pad_ref[:, :, W + 1:W + 2, :] = jnp.zeros((Bt, H + 2, 1, Cmid), jnp.bfloat16)
        pad_ref[:, 1:H + 1, 1:W + 1, :] = (
            y1.astype(jnp.bfloat16).reshape(Bt, H, W, Cmid))

        # fill patches with 9 direct sliced stores (no slice-then-concat copy)
        for k in range(9):
            dy, dx = divmod(k, 3)
            patch_ref[:, k * Cmid:(k + 1) * Cmid] = (
                pad_ref[:, dy:dy + H, dx:dx + W, :].reshape(M, Cmid))

        y2 = jnp.dot(patch_ref[...], w2_ref[...],
                     preferred_element_type=jnp.float32)
        y2 = _leaky(y2 + b2_ref[...])

        # ---- conv3 (1x1) + bn3, residual add, final LeakyReLU ----------------
        y3 = jnp.dot(y2.astype(jnp.bfloat16), w3_ref[...],
                     preferred_element_type=jnp.float32) + b3_ref[...]
        y3 = y3.reshape(Bt, H, W, Cout)
        if has_downsample:
            out_ref[...] = _leaky(y3 + out_ref[...])
        else:
            # identity shortcut: residual straight from x (no eye-matmul)
            out_ref[...] = _leaky(y3 + x_ref[...].astype(jnp.float32))

    return kernel


# ---------------------------------------------------------------------------
# tiling / VMEM heuristics
# ---------------------------------------------------------------------------
def _vmem_limit_bytes():
    cap = 128 * 1024 * 1024
    try:
        info = pltpu.get_tpu_info()
        cap = int(getattr(info, "vmem_capacity_bytes", cap))
    except Exception:
        pass
    # generation-aware scoped limit: ~half physical, capped at 96 MiB
    # (v5e/v6e: 64 MiB of 128 MiB; v7x: 32 MiB of 64 MiB)
    return min(cap // 2, 96 * 1024 * 1024)


def _pick_batch_tile(N, H, W, Cin, Cmid, Cout, weight_bytes, budget_bytes):
    """Largest batch chunk (divisor of N) whose modeled working set fits the
    budget, while keeping the grid at >= min(4, N) steps for pipelining."""
    min_steps = min(4, N)
    best = 1
    for bt in range(1, N + 1):
        if N % bt or (N // bt) < min_steps:
            continue
        rows = bt * H * W
        ws = (
            weight_bytes
            + 2 * rows * Cin * 2                         # x block, bf16, 2x buffered
            + 2 * rows * Cout * 4                        # out block, f32, 2x buffered
            + bt * (H + 2) * (W + 2) * Cmid * 2          # bf16 halo scratch
            + rows * 9 * Cmid * 2                        # bf16 im2col scratch
            + rows * (8 * Cout + 16 * Cmid)              # f32/bf16 intermediates
        )
        if ws <= budget_bytes:
            best = max(best, bt)
    return best


def _const_spec(shape):
    """BlockSpec for a grid-invariant operand (single-buffered if supported)."""
    ndim = len(shape)
    idx = lambda n, _nd=ndim: (0,) * _nd
    if _SINGLE_BUFFER is not None:
        try:
            return pl.BlockSpec(shape, idx, pipeline_mode=_SINGLE_BUFFER)
        except TypeError:
            pass
    return pl.BlockSpec(shape, idx)


# ---------------------------------------------------------------------------
# wrapper
# ---------------------------------------------------------------------------
def bottleneck_forward(x_nchw, params):
    """x_nchw: (N, Cin, H, W) float32. Returns (N, 4*channels, H, W) float32."""
    N, Cin, H, W = x_nchw.shape
    # TODO(synk): keep the surrounding net NHWC to drop these HBM transposes.
    x = jnp.transpose(x_nchw, (0, 2, 3, 1)).astype(jnp.bfloat16)   # NHWC, bf16

    # fold eval-mode BN (scale into weights, keep bias for in-kernel add)
    s1, b1 = _bn_fold(*params["bn1"])
    s2, b2 = _bn_fold(*params["bn2"])
    s3, b3 = _bn_fold(*params["bn3"])

    w1 = jnp.transpose(params["conv1_w"][:, :, 0, 0], (1, 0)) * s1   # (Cin, Cmid)
    w2 = jnp.transpose(params["conv2_w"], (2, 3, 1, 0)) * s2         # (3,3,Cmid,Cmid) HWIO
    w3 = jnp.transpose(params["conv3_w"][:, :, 0, 0], (1, 0)) * s3   # (Cmid, Cout)
    Cmid, Cout = w1.shape[1], w3.shape[1]

    has_downsample = "convd_w" in params
    if has_downsample:   # projection shortcut (in_channels != 4*channels)
        sd, bd = _bn_fold(*params["bnd"])
        wd = jnp.transpose(params["convd_w"][:, :, 0, 0], (1, 0)) * sd   # (Cin, Cout)
        # [downsample | conv1]: Cout = 4*Cmid leads, so both result slices start
        # at 128-aligned columns for standard widths; no zero padding needed.
        w1d = jnp.concatenate([wd, w1], axis=1).astype(jnp.bfloat16)     # (Cin, Cout+Cmid)
    else:                # identity shortcut: residual added from x in-kernel
        assert Cin == Cout, "identity shortcut requires in_channels == 4*channels"
        bd = jnp.zeros((1, Cout), jnp.float32)
        w1d = w1.astype(jnp.bfloat16)                                     # (Cin, Cmid)

    w2f = w2.reshape(9 * Cmid, Cmid).astype(jnp.bfloat16)                 # (9*Cmid, Cmid)
    w3b = w3.astype(jnp.bfloat16)

    vmem_limit = _vmem_limit_bytes()
    buf_factor = 1 if _SINGLE_BUFFER is not None else 2
    weight_bytes = buf_factor * (
        2 * (w1d.size + w2f.size + w3b.size)
        + 4 * (b1.size + b2.size + b3.size + bd.size))
    Bt = _pick_batch_tile(N, H, W, Cin, Cmid, Cout, weight_bytes,
                          int(vmem_limit * 0.85))
    M = Bt * H * W

    out = pl.pallas_call(
        _make_bottleneck_kernel(has_downsample),
        out_shape=jax.ShapeDtypeStruct((N, H, W, Cout), jnp.float32),
        grid_spec=pltpu.PrefetchScalarGridSpec(
            num_scalar_prefetch=0,
            grid=(N // Bt,),
            in_specs=[
                pl.BlockSpec((Bt, H, W, Cin), lambda n: (n, 0, 0, 0)),
                _const_spec(w1d.shape),
                _const_spec(w2f.shape),
                _const_spec(w3b.shape),
                _const_spec(b1.shape), _const_spec(b2.shape),
                _const_spec(b3.shape), _const_spec(bd.shape),
            ],
            out_specs=pl.BlockSpec((Bt, H, W, Cout), lambda n: (n, 0, 0, 0)),
            scratch_shapes=[
                pltpu.VMEM((Bt, H + 2, W + 2, Cmid), jnp.bfloat16),  # halo
                pltpu.VMEM((M, 9 * Cmid), jnp.bfloat16),             # im2col
            ],
        ),
        compiler_params=pltpu.CompilerParams(
            dimension_semantics=("parallel",),
            vmem_limit_bytes=vmem_limit),
    )(x, w1d, w2f, w3b, b1, b2, b3, bd)

    return jnp.transpose(out, (0, 3, 1, 2))  # back to NCHW


# ---------------------------------------------------------------------------
# plain-JAX f32 reference (eval-mode BN), for a sanity check
# ---------------------------------------------------------------------------
def _ref_forward(x_nchw, params):
    x = jnp.transpose(x_nchw, (0, 2, 3, 1))

    def conv(y, w_oihw, pad):
        w = jnp.transpose(w_oihw, (2, 3, 1, 0))  # HWIO
        return jax.lax.conv_general_dilated(
            y, w, (1, 1), pad, dimension_numbers=("NHWC", "HWIO", "NHWC"))

    def bn(y, p):
        s, b = _bn_fold(*p)
        return y * s[None] + b[None]

    def leaky(y):
        return jnp.where(y > 0, y, NEG_SLOPE * y)

    y = leaky(bn(conv(x, params["conv1_w"], "VALID"), params["bn1"]))
    y = leaky(bn(conv(y, params["conv2_w"], ((1, 1), (1, 1))), params["bn2"]))
    y = bn(conv(y, params["conv3_w"], "VALID"), params["bn3"])
    if "convd_w" in params:
        xd = bn(conv(x, params["convd_w"], "VALID"), params["bnd"])
    else:
        xd = x
    y = leaky(y + xd)
    return jnp.transpose(y, (0, 3, 1, 2))


def _init_params(key, in_channels, channels, with_downsample):
    cout = MULTIPLE * channels
    ks = jax.random.split(key, 8)

    def bn_params(k, c):
        k1, k2, k3, k4 = jax.random.split(k, 4)
        gamma = 1.0 + 0.1 * jax.random.normal(k1, (c,), jnp.float32)
        beta = 0.1 * jax.random.normal(k2, (c,), jnp.float32)
        mean = 0.1 * jax.random.normal(k3, (c,), jnp.float32)
        var = jnp.abs(jax.random.normal(k4, (c,), jnp.float32)) + 0.5
        return gamma, beta, mean, var

    params = {
        "conv1_w": 0.1 * jax.random.normal(ks[0], (channels, in_channels, 1, 1), jnp.float32),
        "conv2_w": 0.1 * jax.random.normal(ks[1], (channels, channels, 3, 3), jnp.float32),
        "conv3_w": 0.1 * jax.random.normal(ks[2], (cout, channels, 1, 1), jnp.float32),
        "bn1": bn_params(ks[4], channels),
        "bn2": bn_params(ks[5], channels),
        "bn3": bn_params(ks[6], cout),
    }
    if with_downsample:
        params["convd_w"] = 0.1 * jax.random.normal(
            ks[3], (cout, in_channels, 1, 1), jnp.float32)
        params["bnd"] = bn_params(ks[7], cout)
    return params


if __name__ == "__main__":
    key = jax.random.PRNGKey(0)
    k_x1, k_p1, k_x2, k_p2 = jax.random.split(key, 4)

    H, W = 8, 8

    # 1) projection shortcut (in_channels != 4*channels)
    N, in_channels, ch = 2, 16, 8          # -> output channels = 32
    x = jax.random.normal(k_x1, (N, in_channels, H, W), jnp.float32)
    params = _init_params(k_p1, in_channels, ch, with_downsample=True)
    out = jax.block_until_ready(bottleneck_forward(x, params))
    ref = _ref_forward(x, params)
    assert out.shape == (N, MULTIPLE * ch, H, W)
    # bf16 MXU inputs with f32 accumulation -> loosened tolerance vs f32 reference
    assert jnp.allclose(out, ref, atol=3e-2, rtol=3e-2), "projection-path mismatch"

    # 2) identity shortcut (in_channels == 4*channels)
    ch2 = 8
    in2 = MULTIPLE * ch2                    # 32 -> identity downsample
    x2 = jax.random.normal(k_x2, (N, in2, H, W), jnp.float32)
    params2 = _init_params(k_p2, in2, ch2, with_downsample=False)
    out2 = jax.block_until_ready(bottleneck_forward(x2, params2))
    ref2 = _ref_forward(x2, params2)
    assert out2.shape == (N, MULTIPLE * ch2, H, W)
    assert jnp.allclose(out2, ref2, atol=3e-2, rtol=3e-2), "identity-path mismatch"

    print("KERNEL_OK")
</pallas_src>

<mosaic_0001>
module attributes {stable_mosaic.version = 11 : i64} {
  func.func @kernel(%arg0: i32, %arg1: memref<1x8x8x16xbf16, #tpu.memory_space<vmem>>, %arg2: memref<16x40xbf16, #tpu.memory_space<vmem>>, %arg3: memref<72x8xbf16, #tpu.memory_space<vmem>>, %arg4: memref<8x32xbf16, #tpu.memory_space<vmem>>, %arg5: memref<1x8xf32, #tpu.memory_space<vmem>>, %arg6: memref<1x8xf32, #tpu.memory_space<vmem>>, %arg7: memref<1x32xf32, #tpu.memory_space<vmem>>, %arg8: memref<1x32xf32, #tpu.memory_space<vmem>>, %arg9: memref<1x8x8x32xf32, #tpu.memory_space<vmem>>, %arg10: memref<1x10x10x8xbf16, #tpu.memory_space<vmem>>, %arg11: memref<64x72xbf16, #tpu.memory_space<vmem>>) attributes {dimension_semantics = [#tpu.dimension_semantics<parallel>], iteration_bounds = array<i64: 2>, scalar_prefetch = 0 : i64, scratch_operands = 2 : i64, tpu.core_type = #tpu.core_type<tc>, window_params = [{transform_indices = @transform_0, window_bounds = array<i64: 1, 8, 8, 16>}, {pipeline_mode = #tpu.pipeline_mode<synchronous>, transform_indices = @transform_1, window_bounds = array<i64: 16, 40>}, {pipeline_mode = #tpu.pipeline_mode<synchronous>, transform_indices = @transform_2, window_bounds = array<i64: 72, 8>}, {pipeline_mode = #tpu.pipeline_mode<synchronous>, transform_indices = @transform_3, window_bounds = array<i64: 8, 32>}, {pipeline_mode = #tpu.pipeline_mode<synchronous>, transform_indices = @transform_4, window_bounds = array<i64: 1, 8>}, {pipeline_mode = #tpu.pipeline_mode<synchronous>, transform_indices = @transform_5, window_bounds = array<i64: 1, 8>}, {pipeline_mode = #tpu.pipeline_mode<synchronous>, transform_indices = @transform_6, window_bounds = array<i64: 1, 32>}, {pipeline_mode = #tpu.pipeline_mode<synchronous>, transform_indices = @transform_7, window_bounds = array<i64: 1, 32>}, {transform_indices = @transform_8, window_bounds = array<i64: 1, 8, 8, 32>}]} {
    %c0 = arith.constant 0 : index
    %c0_0 = arith.constant 0 : index
    %c0_1 = arith.constant 0 : index
    %c0_2 = arith.constant 0 : index
    %0 = vector.load %arg1[%c0, %c0_0, %c0_1, %c0_2] : memref<1x8x8x16xbf16, #tpu.memory_space<vmem>>, vector<1x8x8x16xbf16>
    %1 = vector.shape_cast %0 : vector<1x8x8x16xbf16> to vector<64x16xbf16>
    %c0_3 = arith.constant 0 : index
    %c0_4 = arith.constant 0 : index
    %2 = vector.load %arg2[%c0_3, %c0_4] : memref<16x40xbf16, #tpu.memory_space<vmem>>, vector<16x40xbf16>
    %cst = arith.constant dense<0.000000e+00> : vector<64x40xf32>
    %3 = tpu.matmul %1, %2, %cst {dimension_numbers = #tpu.dot_dimension_numbers<[1], [0], [0], [1], [0, 0, 1, 1], [], []>} : vector<64x16xbf16>, vector<16x40xbf16>, vector<64x40xf32> -> vector<64x40xf32>
    %4 = vector.extract_strided_slice %3 {offsets = [0, 0], sizes = [64, 32], strides = [1, 1]} : vector<64x40xf32> to vector<64x32xf32>
    %c0_5 = arith.constant 0 : index
    %c0_6 = arith.constant 0 : index
    %5 = vector.load %arg8[%c0_5, %c0_6] : memref<1x32xf32, #tpu.memory_space<vmem>>, vector<1x32xf32>
    %6 = vector.broadcast %5 : vector<1x32xf32> to vector<64x32xf32>
    %7 = arith.addf %4, %6 : vector<64x32xf32>
    %8 = vector.shape_cast %7 : vector<64x32xf32> to vector<1x8x8x32xf32>
    %c0_7 = arith.constant 0 : index
    %c0_8 = arith.constant 0 : index
    %c0_9 = arith.constant 0 : index
    %c0_10 = arith.constant 0 : index
    %9 = vector.load %arg9[%c0_7, %c0_8, %c0_9, %c0_10] : memref<1x8x8x32xf32, #tpu.memory_space<vmem>>, vector<1x8x8x32xf32>
    tpu.vector_store %arg9[%c0_7, %c0_8, %c0_9, %c0_10], %8 {strides = array<i32>} : memref<1x8x8x32xf32, #tpu.memory_space<vmem>>, vector<1x8x8x32xf32>,
    %10 = vector.extract_strided_slice %3 {offsets = [0, 32], sizes = [64, 8], strides = [1, 1]} : vector<64x40xf32> to vector<64x8xf32>
    %c0_11 = arith.constant 0 : index
    %c0_12 = arith.constant 0 : index
    %11 = vector.load %arg5[%c0_11, %c0_12] : memref<1x8xf32, #tpu.memory_space<vmem>>, vector<1x8xf32>
    %12 = vector.broadcast %11 : vector<1x8xf32> to vector<64x8xf32>
    %13 = arith.addf %10, %12 : vector<64x8xf32>
    %cst_13 = arith.constant 0.00999999977 : f32
    %14 = vector.broadcast %cst_13 : f32 to vector<64x8xf32>
    %15 = arith.mulf %14, %13 : vector<64x8xf32>
    %16 = arith.maximumf %13, %15 : vector<64x8xf32>
    %cst_14 = arith.constant 0.000000e+00 : bf16
    %17 = vector.broadcast %cst_14 : bf16 to vector<1x1x10x8xbf16>
    %c0_15 = arith.constant 0 : index
    %c0_16 = arith.constant 0 : index
    %c0_17 = arith.constant 0 : index
    %c0_18 = arith.constant 0 : index
    %18 = vector.load %arg10[%c0_15, %c0_16, %c0_17, %c0_18] : memref<1x10x10x8xbf16, #tpu.memory_space<vmem>>, vector<1x1x10x8xbf16>
    tpu.vector_store %arg10[%c0_15, %c0_16, %c0_17, %c0_18], %17 {strides = array<i32>} : memref<1x10x10x8xbf16, #tpu.memory_space<vmem>>, vector<1x1x10x8xbf16>,
    %cst_19 = arith.constant 0.000000e+00 : bf16
    %19 = vector.broadcast %cst_19 : bf16 to vector<1x1x10x8xbf16>
    %c0_20 = arith.constant 0 : index
    %c9 = arith.constant 9 : index
    %c0_21 = arith.constant 0 : index
    %c0_22 = arith.constant 0 : index
    %20 = vector.load %arg10[%c0_20, %c9, %c0_21, %c0_22] : memref<1x10x10x8xbf16, #tpu.memory_space<vmem>>, vector<1x1x10x8xbf16>
    tpu.vector_store %arg10[%c0_20, %c9, %c0_21, %c0_22], %19 {strides = array<i32>} : memref<1x10x10x8xbf16, #tpu.memory_space<vmem>>, vector<1x1x10x8xbf16>,
    %cst_23 = arith.constant 0.000000e+00 : bf16
    %21 = vector.broadcast %cst_23 : bf16 to vector<1x10x1x8xbf16>
    %c0_24 = arith.constant 0 : index
    %c0_25 = arith.constant 0 : index
    %c0_26 = arith.constant 0 : index
    %c0_27 = arith.constant 0 : index
    %22 = vector.load %arg10[%c0_24, %c0_25, %c0_26, %c0_27] : memref<1x10x10x8xbf16, #tpu.memory_space<vmem>>, vector<1x10x1x8xbf16>
    tpu.vector_store %arg10[%c0_24, %c0_25, %c0_26, %c0_27], %21 {strides = array<i32>} : memref<1x10x10x8xbf16, #tpu.memory_space<vmem>>, vector<1x10x1x8xbf16>,
    %cst_28 = arith.constant 0.000000e+00 : bf16
    %23 = vector.broadcast %cst_28 : bf16 to vector<1x10x1x8xbf16>
    %c0_29 = arith.constant 0 : index
    %c0_30 = arith.constant 0 : index
    %c9_31 = arith.constant 9 : index
    %c0_32 = arith.constant 0 : index
    %24 = vector.load %arg10[%c0_29, %c0_30, %c9_31, %c0_32] : memref<1x10x10x8xbf16, #tpu.memory_space<vmem>>, vector<1x10x1x8xbf16>
    tpu.vector_store %arg10[%c0_29, %c0_30, %c9_31, %c0_32], %23 {strides = array<i32>} : memref<1x10x10x8xbf16, #tpu.memory_space<vmem>>, vector<1x10x1x8xbf16>,
    %25 = arith.truncf %16 : vector<64x8xf32> to vector<64x8xbf16>
    %26 = vector.shape_cast %25 : vector<64x8xbf16> to vector<1x8x8x8xbf16>
    %c0_33 = arith.constant 0 : index
    %c1 = arith.constant 1 : index
    %c1_34 = arith.constant 1 : index
    %c0_35 = arith.constant 0 : index
    %27 = vector.load %arg10[%c0_33, %c1, %c1_34, %c0_35] : memref<1x10x10x8xbf16, #tpu.memory_space<vmem>>, vector<1x8x8x8xbf16>
    tpu.vector_store %arg10[%c0_33, %c1, %c1_34, %c0_35], %26 {strides = array<i32>} : memref<1x10x10x8xbf16, #tpu.memory_space<vmem>>, vector<1x8x8x8xbf16>,
    %c0_36 = arith.constant 0 : index
    %c0_37 = arith.constant 0 : index
    %c0_38 = arith.constant 0 : index
    %c0_39 = arith.constant 0 : index
    %28 = vector.load %arg10[%c0_36, %c0_37, %c0_38, %c0_39] : memref<1x10x10x8xbf16, #tpu.memory_space<vmem>>, vector<1x8x8x8xbf16>
    %29 = vector.shape_cast %28 : vector<1x8x8x8xbf16> to vector<64x8xbf16>
    %c0_40 = arith.constant 0 : index
    %c0_41 = arith.constant 0 : index
    %30 = vector.load %arg11[%c0_40, %c0_41] : memref<64x72xbf16, #tpu.memory_space<vmem>>, vector<64x8xbf16>
    tpu.vector_store %arg11[%c0_40, %c0_41], %29 {strides = array<i32>} : memref<64x72xbf16, #tpu.memory_space<vmem>>, vector<64x8xbf16>,
    %c0_42 = arith.constant 0 : index
    %c0_43 = arith.constant 0 : index
    %c1_44 = arith.constant 1 : index
    %c0_45 = arith.constant 0 : index
    %31 = vector.load %arg10[%c0_42, %c0_43, %c1_44, %c0_45] : memref<1x10x10x8xbf16, #tpu.memory_space<vmem>>, vector<1x8x8x8xbf16>
    %32 = vector.shape_cast %31 : vector<1x8x8x8xbf16> to vector<64x8xbf16>
    %c0_46 = arith.constant 0 : index
    %c8 = arith.constant 8 : index
    %33 = vector.load %arg11[%c0_46, %c8] : memref<64x72xbf16, #tpu.memory_space<vmem>>, vector<64x8xbf16>
    tpu.vector_store %arg11[%c0_46, %c8], %32 {strides = array<i32>} : memref<64x72xbf16, #tpu.memory_space<vmem>>, vector<64x8xbf16>,
    %c0_47 = arith.constant 0 : index
    %c0_48 = arith.constant 0 : index
    %c2 = arith.constant 2 : index
    %c0_49 = arith.constant 0 : index
    %34 = vector.load %arg10[%c0_47, %c0_48, %c2, %c0_49] : memref<1x10x10x8xbf16, #tpu.memory_space<vmem>>, vector<1x8x8x8xbf16>
    %35 = vector.shape_cast %34 : vector<1x8x8x8xbf16> to vector<64x8xbf16>
    %c0_50 = arith.constant 0 : index
    %c16 = arith.constant 16 : index
    %36 = vector.load %arg11[%c0_50, %c16] : memref<64x72xbf16, #tpu.memory_space<vmem>>, vector<64x8xbf16>
    tpu.vector_store %arg11[%c0_50, %c16], %35 {strides = array<i32>} : memref<64x72xbf16, #tpu.memory_space<vmem>>, vector<64x8xbf16>,
    %c0_51 = arith.constant 0 : index
    %c1_52 = arith.constant 1 : index
    %c0_53 = arith.constant 0 : index
    %c0_54 = arith.constant 0 : index
    %37 = vector.load %arg10[%c0_51, %c1_52, %c0_53, %c0_54] : memref<1x10x10x8xbf16, #tpu.memory_space<vmem>>, vector<1x8x8x8xbf16>
    %38 = vector.shape_cast %37 : vector<1x8x8x8xbf16> to vector<64x8xbf16>
    %c0_55 = arith.constant 0 : index
    %c24 = arith.constant 24 : index
    %39 = vector.load %arg11[%c0_55, %c24] : memref<64x72xbf16, #tpu.memory_space<vmem>>, vector<64x8xbf16>
    tpu.vector_store %arg11[%c0_55, %c24], %38 {strides = array<i32>} : memref<64x72xbf16, #tpu.memory_space<vmem>>, vector<64x8xbf16>,
    %c0_56 = arith.constant 0 : index
    %c1_57 = arith.constant 1 : index
    %c1_58 = arith.constant 1 : index
    %c0_59 = arith.constant 0 : index
    %40 = vector.load %arg10[%c0_56, %c1_57, %c1_58, %c0_59] : memref<1x10x10x8xbf16, #tpu.memory_space<vmem>>, vector<1x8x8x8xbf16>
    %41 = vector.shape_cast %40 : vector<1x8x8x8xbf16> to vector<64x8xbf16>
    %c0_60 = arith.constant 0 : index
    %c32 = arith.constant 32 : index
    %42 = vector.load %arg11[%c0_60, %c32] : memref<64x72xbf16, #tpu.memory_space<vmem>>, vector<64x8xbf16>
    tpu.vector_store %arg11[%c0_60, %c32], %41 {strides = array<i32>} : memref<64x72xbf16, #tpu.memory_space<vmem>>, vector<64x8xbf16>,
    %c0_61 = arith.constant 0 : index
    %c1_62 = arith.constant 1 : index
    %c2_63 = arith.constant 2 : index
    %c0_64 = arith.constant 0 : index
    %43 = vector.load %arg10[%c0_61, %c1_62, %c2_63, %c0_64] : memref<1x10x10x8xbf16, #tpu.memory_space<vmem>>, vector<1x8x8x8xbf16>
    %44 = vector.shape_cast %43 : vector<1x8x8x8xbf16> to vector<64x8xbf16>
    %c0_65 = arith.constant 0 : index
    %c40 = arith.constant 40 : index
    %45 = vector.load %arg11[%c0_65, %c40] : memref<64x72xbf16, #tpu.memory_space<vmem>>, vector<64x8xbf16>
    tpu.vector_store %arg11[%c0_65, %c40], %44 {strides = array<i32>} : memref<64x72xbf16, #tpu.memory_space<vmem>>, vector<64x8xbf16>,
    %c0_66 = arith.constant 0 : index
    %c2_67 = arith.constant 2 : index
    %c0_68 = arith.constant 0 : index
    %c0_69 = arith.constant 0 : index
    %46 = vector.load %arg10[%c0_66, %c2_67, %c0_68, %c0_69] : memref<1x10x10x8xbf16, #tpu.memory_space<vmem>>, vector<1x8x8x8xbf16>
    %47 = vector.shape_cast %46 : vector<1x8x8x8xbf16> to vector<64x8xbf16>
    %c0_70 = arith.constant 0 : index
    %c48 = arith.constant 48 : index
    %48 = vector.load %arg11[%c0_70, %c48] : memref<64x72xbf16, #tpu.memory_space<vmem>>, vector<64x8xbf16>
    tpu.vector_store %arg11[%c0_70, %c48], %47 {strides = array<i32>} : memref<64x72xbf16, #tpu.memory_space<vmem>>, vector<64x8xbf16>,
    %c0_71 = arith.constant 0 : index
    %c2_72 = arith.constant 2 : index
    %c1_73 = arith.constant 1 : index
    %c0_74 = arith.constant 0 : index
    %49 = vector.load %arg10[%c0_71, %c2_72, %c1_73, %c0_74] : memref<1x10x10x8xbf16, #tpu.memory_space<vmem>>, vector<1x8x8x8xbf16>
    %50 = vector.shape_cast %49 : vector<1x8x8x8xbf16> to vector<64x8xbf16>
    %c0_75 = arith.constant 0 : index
    %c56 = arith.constant 56 : index
    %51 = vector.load %arg11[%c0_75, %c56] : memref<64x72xbf16, #tpu.memory_space<vmem>>, vector<64x8xbf16>
    tpu.vector_store %arg11[%c0_75, %c56], %50 {strides = array<i32>} : memref<64x72xbf16, #tpu.memory_space<vmem>>, vector<64x8xbf16>,
    %c0_76 = arith.constant 0 : index
    %c2_77 = arith.constant 2 : index
    %c2_78 = arith.constant 2 : index
    %c0_79 = arith.constant 0 : index
    %52 = vector.load %arg10[%c0_76, %c2_77, %c2_78, %c0_79] : memref<1x10x10x8xbf16, #tpu.memory_space<vmem>>, vector<1x8x8x8xbf16>
    %53 = vector.shape_cast %52 : vector<1x8x8x8xbf16> to vector<64x8xbf16>
    %c0_80 = arith.constant 0 : index
    %c64 = arith.constant 64 : index
    %54 = vector.load %arg11[%c0_80, %c64] : memref<64x72xbf16, #tpu.memory_space<vmem>>, vector<64x8xbf16>
    tpu.vector_store %arg11[%c0_80, %c64], %53 {strides = array<i32>} : memref<64x72xbf16, #tpu.memory_space<vmem>>, vector<64x8xbf16>,
    %c0_81 = arith.constant 0 : index
    %c0_82 = arith.constant 0 : index
    %55 = vector.load %arg11[%c0_81, %c0_82] : memref<64x72xbf16, #tpu.memory_space<vmem>>, vector<64x72xbf16>
    %c0_83 = arith.constant 0 : index
    %c0_84 = arith.constant 0 : index
    %56 = vector.load %arg3[%c0_83, %c0_84] : memref<72x8xbf16, #tpu.memory_space<vmem>>, vector<72x8xbf16>
    %cst_85 = arith.constant dense<0.000000e+00> : vector<64x8xf32>
    %57 = tpu.matmul %55, %56, %cst_85 {dimension_numbers = #tpu.dot_dimension_numbers<[1], [0], [0], [1], [0, 0, 1, 1], [], []>} : vector<64x72xbf16>, vector<72x8xbf16>, vector<64x8xf32> -> vector<64x8xf32>
    %c0_86 = arith.constant 0 : index
    %c0_87 = arith.constant 0 : index
    %58 = vector.load %arg6[%c0_86, %c0_87] : memref<1x8xf32, #tpu.memory_space<vmem>>, vector<1x8xf32>
    %59 = vector.broadcast %58 : vector<1x8xf32> to vector<64x8xf32>
    %60 = arith.addf %57, %59 : vector<64x8xf32>
    %cst_88 = arith.constant 0.00999999977 : f32
    %61 = vector.broadcast %cst_88 : f32 to vector<64x8xf32>
    %62 = arith.mulf %61, %60 : vector<64x8xf32>
    %63 = arith.maximumf %60, %62 : vector<64x8xf32>
    %64 = arith.truncf %63 : vector<64x8xf32> to vector<64x8xbf16>
    %c0_89 = arith.constant 0 : index
    %c0_90 = arith.constant 0 : index
    %65 = vector.load %arg4[%c0_89, %c0_90] : memref<8x32xbf16, #tpu.memory_space<vmem>>, vector<8x32xbf16>
    %cst_91 = arith.constant dense<0.000000e+00> : vector<64x32xf32>
    %66 = tpu.matmul %64, %65, %cst_91 {dimension_numbers = #tpu.dot_dimension_numbers<[1], [0], [0], [1], [0, 0, 1, 1], [], []>} : vector<64x8xbf16>, vector<8x32xbf16>, vector<64x32xf32> -> vector<64x32xf32>
    %c0_92 = arith.constant 0 : index
    %c0_93 = arith.constant 0 : index
    %67 = vector.load %arg7[%c0_92, %c0_93] : memref<1x32xf32, #tpu.memory_space<vmem>>, vector<1x32xf32>
    %68 = vector.broadcast %67 : vector<1x32xf32> to vector<64x32xf32>
    %69 = arith.addf %66, %68 : vector<64x32xf32>
    %70 = vector.shape_cast %69 : vector<64x32xf32> to vector<1x8x8x32xf32>
    %c0_94 = arith.constant 0 : index
    %c0_95 = arith.constant 0 : index
    %c0_96 = arith.constant 0 : index
    %c0_97 = arith.constant 0 : index
    %71 = vector.load %arg9[%c0_94, %c0_95, %c0_96, %c0_97] : memref<1x8x8x32xf32, #tpu.memory_space<vmem>>, vector<1x8x8x32xf32>
    %72 = arith.addf %70, %71 : vector<1x8x8x32xf32>
    %cst_98 = arith.constant 0.00999999977 : f32
    %73 = vector.broadcast %cst_98 : f32 to vector<1x8x8x32xf32>
    %74 = arith.mulf %73, %72 : vector<1x8x8x32xf32>
    %75 = arith.maximumf %72, %74 : vector<1x8x8x32xf32>
    %c0_99 = arith.constant 0 : index
    %c0_100 = arith.constant 0 : index
    %c0_101 = arith.constant 0 : index
    %c0_102 = arith.constant 0 : index
    %76 = vector.load %arg9[%c0_99, %c0_100, %c0_101, %c0_102] : memref<1x8x8x32xf32, #tpu.memory_space<vmem>>, vector<1x8x8x32xf32>
    tpu.vector_store %arg9[%c0_99, %c0_100, %c0_101, %c0_102], %75 {strides = array<i32>} : memref<1x8x8x32xf32, #tpu.memory_space<vmem>>, vector<1x8x8x32xf32>,
    return
  }
  func.func @transform_0(%arg0: i32) -> (i32, i32, i32, i32) {
    %c0_i32 = arith.constant 0 : i32
    %c0_i32_0 = arith.constant 0 : i32
    %c0_i32_1 = arith.constant 0 : i32
    %c0_i32_2 = arith.constant 0 : i32
    return %arg0, %c0_i32, %c0_i32_0, %c0_i32_1 : i32, i32, i32, i32
  }
  func.func @transform_1(%arg0: i32) -> (i32, i32) {
    %c0_i32 = arith.constant 0 : i32
    %c0_i32_0 = arith.constant 0 : i32
    %c0_i32_1 = arith.constant 0 : i32
    return %c0_i32, %c0_i32_0 : i32, i32
  }
  func.func @transform_2(%arg0: i32) -> (i32, i32) {
    %c0_i32 = arith.constant 0 : i32
    %c0_i32_0 = arith.constant 0 : i32
    %c0_i32_1 = arith.constant 0 : i32
    return %c0_i32, %c0_i32_0 : i32, i32
  }
  func.func @transform_3(%arg0: i32) -> (i32, i32) {
    %c0_i32 = arith.constant 0 : i32
    %c0_i32_0 = arith.constant 0 : i32
    %c0_i32_1 = arith.constant 0 : i32
    return %c0_i32, %c0_i32_0 : i32, i32
  }
  func.func @transform_4(%arg0: i32) -> (i32, i32) {
    %c0_i32 = arith.constant 0 : i32
    %c0_i32_0 = arith.constant 0 : i32
    %c0_i32_1 = arith.constant 0 : i32
    return %c0_i32, %c0_i32_0 : i32, i32
  }
  func.func @transform_5(%arg0: i32) -> (i32, i32) {
    %c0_i32 = arith.constant 0 : i32
    %c0_i32_0 = arith.constant 0 : i32
    %c0_i32_1 = arith.constant 0 : i32
    return %c0_i32, %c0_i32_0 : i32, i32
  }
  func.func @transform_6(%arg0: i32) -> (i32, i32) {
    %c0_i32 = arith.constant 0 : i32
    %c0_i32_0 = arith.constant 0 : i32
    %c0_i32_1 = arith.constant 0 : i32
    return %c0_i32, %c0_i32_0 : i32, i32
  }
  func.func @transform_7(%arg0: i32) -> (i32, i32) {
    %c0_i32 = arith.constant 0 : i32
    %c0_i32_0 = arith.constant 0 : i32
    %c0_i32_1 = arith.constant 0 : i32
    return %c0_i32, %c0_i32_0 : i32, i32
  }
  func.func @transform_8(%arg0: i32) -> (i32, i32, i32, i32) {
    %c0_i32 = arith.constant 0 : i32
    %c0_i32_0 = arith.constant 0 : i32
    %c0_i32_1 = arith.constant 0 : i32
    %c0_i32_2 = arith.constant 0 : i32
    return %arg0, %c0_i32, %c0_i32_0, %c0_i32_1 : i32, i32, i32, i32
  }
}

</mosaic_0001>

<llo_original>
// kernel: tpu_custom_call.1
$region0: #{tpu_custom_call.1}
  #allocation0 [shape = 'u32[]', space=smem, size = 0x4, offset = 0x4, fixed_abs, tag = 'smem constant byte address 0x4 - core index']
  #allocation1 [shape = 'u32[144,128]{1,0:T(1,128)}', space=vmem, size = 0x12000, scoped, tag = 'internal scratch']
  #allocation2 [shape = 'bf16[1,10,10,8]{3,2,1,0:T(8,128)(2,1)}', space=vmem, size = 0xa000, scoped, tag = 'scratch operand']
  #allocation3 [shape = 'bf16[64,72]{1,0:T(16,128)(2,1)}', space=vmem, size = 0x4000, scoped, tag = 'scratch operand']
  %s0 = inlined_call_operand.hbm [shape: bf16[2,8,8,16], index: 0, kind: input, shape index: {}]
  %s1 = inlined_call_operand.hbm [shape: bf16[16,40], index: 1, kind: input, shape index: {}]
  %s2 = inlined_call_operand.hbm [shape: bf16[72,8], index: 2, kind: input, shape index: {}]
  %s3 = inlined_call_operand.hbm [shape: bf16[8,32], index: 3, kind: input, shape index: {}]
  %s4 = inlined_call_operand.hbm [shape: f32[1,8], index: 4, kind: input, shape index: {}]
  %s5 = inlined_call_operand.hbm [shape: f32[1,8], index: 5, kind: input, shape index: {}]
  %s6 = inlined_call_operand.hbm [shape: f32[1,32], index: 6, kind: input, shape index: {}]
  %s7 = inlined_call_operand.hbm [shape: f32[1,32], index: 7, kind: input, shape index: {}]
  %s8 = inlined_call_operand.hbm [shape: f32[2,8,8,32], index: 8, kind: output, shape index: {}]
  %s9 = sld [smem:[#allocation0]]
  $region97: #{tpu_custom_call.1} parent=0
    _
  %s11 = ssub.s32 1, %s9
  %s12 = scalar_select 0, %s11, %s9
  $region1: #{tpu_custom_call.1} parent=0
    #allocation4 [shape = 'u8[32768]{0}', space=vmem, size = 0x8000, scoped, tag = 'input window, operand 0']
    #allocation5 [shape = 's32[2]{0}', space=sflag, size = 0x8, scoped, tag = 'scoped memory for tpu_custom_call.1']
    #allocation6 [shape = 's32[2]{0}', space=sflag, size = 0x8, scoped, tag = 'scoped memory for tpu_custom_call.1']
    #allocation7 [shape = 'u8[4096]{0}', space=vmem, size = 0x1000, scoped, tag = 'input window, operand 1, single buffered']
    #allocation8 [shape = 's32[1]{0}', space=sflag, size = 0x4, scoped, tag = 'scoped memory for tpu_custom_call.1']
    #allocation9 [shape = 'u8[18432]{0}', space=vmem, size = 0x4800, scoped, tag = 'input window, operand 2, single buffered']
    #allocation10 [shape = 'u8[2048]{0}', space=vmem, size = 0x800, scoped, tag = 'input window, operand 3, single buffered']
    #allocation11 [shape = 's32[1]{0}', space=sflag, size = 0x4, scoped, tag = 'scoped memory for tpu_custom_call.1']
    #allocation12 [shape = 'u8[512]{0}', space=vmem, size = 0x400, scoped, tag = 'input window, operand 4, single buffered']
    #allocation13 [shape = 'u8[512]{0}', space=vmem, size = 0x400, scoped, tag = 'input window, operand 5, single buffered']
    #allocation14 [shape = 's32[1]{0}', space=sflag, size = 0x4, scoped, tag = 'scoped memory for tpu_custom_call.1']
    #allocation15 [shape = 'u8[512]{0}', space=vmem, size = 0x400, scoped, tag = 'input window, operand 6, single buffered']
    #allocation16 [shape = 'u8[512]{0}', space=vmem, size = 0x400, scoped, tag = 'input window, operand 7, single buffered']
    #allocation17 [shape = 's32[1]{0}', space=sflag, size = 0x4, scoped, tag = 'scoped memory for tpu_custom_call.1']
    #allocation18 [shape = 'u8[65536]{0}', space=vmem, size = 0x10000, scoped, tag = 'output window, operand 0']
    %13 = vsyncpa [#allocation5], 0
    %s14 = scalar_lea.sflag [#allocation5], 1
    %15 = vsyncpa %s14, 0
    %16 = vsyncpa [#allocation8], 0
    %17 = vsyncpa [#allocation11], 0
    %18 = vsyncpa [#allocation14], 0
    %19 = vsyncpa [#allocation17], 0
    %20 = vsyncpa [#allocation6], 0
    %s21 = scalar_lea.sflag [#allocation6], 1
    %22 = vsyncpa %s21, 0
    loop: start=0, step=1, limit=4
    $region2: #{tpu_custom_call.1} parent=1 // loop_pre_header
      _
    $region3: #{tpu_custom_call.1} parent=1 // loop_header
      %s24 = sphi 0, %s28
      %p25 = scmp.ge.s32.totalorder %s24, 4
      %s34 = sphi 0, %s36
      %s37 = sphi 0, %s34
      %s38 = sphi 0, %s37
      %s54 = sphi 0, %s38
      %s58 = sphi 0, %s58
      %s60 = sphi 0, %s58
      %s61 = sphi 0, %s60
      %s75 = sphi 0, %s61
      %s79 = sphi 0, %s79
      %s81 = sphi 0, %s79
      %s82 = sphi 0, %s81
      %s96 = sphi 0, %s82
      %s100 = sphi 0, %s100
      %s102 = sphi 0, %s100
      %s103 = sphi 0, %s102
      %s117 = sphi 0, %s103
      %s121 = sphi 0, %s121
      %s123 = sphi 0, %s121
      %s124 = sphi 0, %s123
      %s138 = sphi 0, %s124
      %s142 = sphi 0, %s142
      %s144 = sphi 0, %s142
      %s145 = sphi 0, %s144
      %s159 = sphi 0, %s145
      %s163 = sphi 0, %s163
      %s165 = sphi 0, %s163
      %s166 = sphi 0, %s165
      %s180 = sphi 0, %s166
      %s184 = sphi 0, %s184
      %s186 = sphi 0, %s184
      %s187 = sphi 0, %s186
      %s201 = sphi 0, %s187
      %s207 = sphi 0, %s209
      %s210 = sphi 0, %s207
      %s211 = sphi 0, %s210
      %s227 = sphi 0, %s211
    $region4: #{tpu_custom_call.1} parent=1 // loop_header_branch
      %27 = sbr.rel (%p25) target = $region8
    $region5: #{tpu_custom_call.1} parent=1 // loop_body
      %s29 = ssub.s32 %s24, 1
      %s30 = ssub.s32 %s24, 2
      %s31 = sadd.s32 %s24, 1
      %s32 = ssub.s32 %s24, %s31
      %p33 = scmp.eq.s32.totalorder %s32, 0
      %s35 = sadd.s32 %s34, 1
      %s36 = scalar_select %p33, %s34, %s35
      %p39 = pneg %p33
      %p40 = scmp.eq.s32.totalorder %s24, 1
      %p41 = por %p39, %p40
      %p42 = scmp.ne.s32.totalorder %s34, %s37
      %p43 = scmp.eq.s32.totalorder %s24, 0
      %p44 = por %p42, %p43
      %p45 = scmp.ne.s32.totalorder %s34, %s37
      %p46 = scmp.eq.s32.totalorder %s29, 1
      %p47 = por %p45, %p46
      %p48 = scmp.ne.s32.totalorder %s37, %s38
      %p49 = scmp.eq.s32.totalorder %s29, 0
      %p50 = por %p48, %p49
      %p51 = scmp.ne.s32.totalorder %s37, %s38
      %p52 = scmp.eq.s32.totalorder %s30, 1
      %p53 = por %p51, %p52
      %p55 = scmp.ne.s32.totalorder %s38, %s54
      %p56 = scmp.eq.s32.totalorder %s30, 0
      %p57 = por %p55, %p56
      %s59 = sadd.s32 %s58, 1
      %p62 = scmp.eq.s32.totalorder %s24, 1
      %p63 = scmp.ne.s32.totalorder %s58, %s60
      %p64 = scmp.eq.s32.totalorder %s24, 0
      %p65 = por %p63, %p64
      %p66 = scmp.ne.s32.totalorder %s58, %s60
      %p67 = scmp.eq.s32.totalorder %s29, 1
      %p68 = por %p66, %p67
      %p69 = scmp.ne.s32.totalorder %s60, %s61
      %p70 = scmp.eq.s32.totalorder %s29, 0
      %p71 = por %p69, %p70
      %p72 = scmp.ne.s32.totalorder %s60, %s61
      %p73 = scmp.eq.s32.totalorder %s30, 1
      %p74 = por %p72, %p73
      %p76 = scmp.ne.s32.totalorder %s61, %s75
      %p77 = scmp.eq.s32.totalorder %s30, 0
      %p78 = por %p76, %p77
      %s80 = sadd.s32 %s79, 1
      %p83 = scmp.eq.s32.totalorder %s24, 1
      %p84 = scmp.ne.s32.totalorder %s79, %s81
      %p85 = scmp.eq.s32.totalorder %s24, 0
      %p86 = por %p84, %p85
      %p87 = scmp.ne.s32.totalorder %s79, %s81
      %p88 = scmp.eq.s32.totalorder %s29, 1
      %p89 = por %p87, %p88
      %p90 = scmp.ne.s32.totalorder %s81, %s82
      %p91 = scmp.eq.s32.totalorder %s29, 0
      %p92 = por %p90, %p91
      %p93 = scmp.ne.s32.totalorder %s81, %s82
      %p94 = scmp.eq.s32.totalorder %s30, 1
      %p95 = por %p93, %p94
      %p97 = scmp.ne.s32.totalorder %s82, %s96
      %p98 = scmp.eq.s32.totalorder %s30, 0
      %p99 = por %p97, %p98
      %s101 = sadd.s32 %s100, 1
      %p104 = scmp.eq.s32.totalorder %s24, 1
      %p105 = scmp.ne.s32.totalorder %s100, %s102
      %p106 = scmp.eq.s32.totalorder %s24, 0
      %p107 = por %p105, %p106
      %p108 = scmp.ne.s32.totalorder %s100, %s102
      %p109 = scmp.eq.s32.totalorder %s29, 1
      %p110 = por %p108, %p109
      %p111 = scmp.ne.s32.totalorder %s102, %s103
      %p112 = scmp.eq.s32.totalorder %s29, 0
      %p113 = por %p111, %p112
      %p114 = scmp.ne.s32.totalorder %s102, %s103
      %p115 = scmp.eq.s32.totalorder %s30, 1
      %p116 = por %p114, %p115
      %p118 = scmp.ne.s32.totalorder %s103, %s117
      %p119 = scmp.eq.s32.totalorder %s30, 0
      %p120 = por %p118, %p119
      %s122 = sadd.s32 %s121, 1
      %p125 = scmp.eq.s32.totalorder %s24, 1
      %p126 = scmp.ne.s32.totalorder %s121, %s123
      %p127 = scmp.eq.s32.totalorder %s24, 0
      %p128 = por %p126, %p127
      %p129 = scmp.ne.s32.totalorder %s121, %s123
      %p130 = scmp.eq.s32.totalorder %s29, 1
      %p131 = por %p129, %p130
      %p132 = scmp.ne.s32.totalorder %s123, %s124
      %p133 = scmp.eq.s32.totalorder %s29, 0
      %p134 = por %p132, %p133
      %p135 = scmp.ne.s32.totalorder %s123, %s124
      %p136 = scmp.eq.s32.totalorder %s30, 1
      %p137 = por %p135, %p136
      %p139 = scmp.ne.s32.totalorder %s124, %s138
      %p140 = scmp.eq.s32.totalorder %s30, 0
      %p141 = por %p139, %p140
      %s143 = sadd.s32 %s142, 1
      %p146 = scmp.eq.s32.totalorder %s24, 1
      %p147 = scmp.ne.s32.totalorder %s142, %s144
      %p148 = scmp.eq.s32.totalorder %s24, 0
      %p149 = por %p147, %p148
      %p150 = scmp.ne.s32.totalorder %s142, %s144
      %p151 = scmp.eq.s32.totalorder %s29, 1
      %p152 = por %p150, %p151
      %p153 = scmp.ne.s32.totalorder %s144, %s145
      %p154 = scmp.eq.s32.totalorder %s29, 0
      %p155 = por %p153, %p154
      %p156 = scmp.ne.s32.totalorder %s144, %s145
      %p157 = scmp.eq.s32.totalorder %s30, 1
      %p158 = por %p156, %p157
      %p160 = scmp.ne.s32.totalorder %s145, %s159
      %p161 = scmp.eq.s32.totalorder %s30, 0
      %p162 = por %p160, %p161
      %s164 = sadd.s32 %s163, 1
      %p167 = scmp.eq.s32.totalorder %s24, 1
      %p168 = scmp.ne.s32.totalorder %s163, %s165
      %p169 = scmp.eq.s32.totalorder %s24, 0
      %p170 = por %p168, %p169
      %p171 = scmp.ne.s32.totalorder %s163, %s165
      %p172 = scmp.eq.s32.totalorder %s29, 1
      %p173 = por %p171, %p172
      %p174 = scmp.ne.s32.totalorder %s165, %s166
      %p175 = scmp.eq.s32.totalorder %s29, 0
      %p176 = por %p174, %p175
      %p177 = scmp.ne.s32.totalorder %s165, %s166
      %p178 = scmp.eq.s32.totalorder %s30, 1
      %p179 = por %p177, %p178
      %p181 = scmp.ne.s32.totalorder %s166, %s180
      %p182 = scmp.eq.s32.totalorder %s30, 0
      %p183 = por %p181, %p182
      %s185 = sadd.s32 %s184, 1
      %p188 = scmp.eq.s32.totalorder %s24, 1
      %p189 = scmp.ne.s32.totalorder %s184, %s186
      %p190 = scmp.eq.s32.totalorder %s24, 0
      %p191 = por %p189, %p190
      %p192 = scmp.ne.s32.totalorder %s184, %s186
      %p193 = scmp.eq.s32.totalorder %s29, 1
      %p194 = por %p192, %p193
      %p195 = scmp.ne.s32.totalorder %s186, %s187
      %p196 = scmp.eq.s32.totalorder %s29, 0
      %p197 = por %p195, %p196
      %p198 = scmp.ne.s32.totalorder %s186, %s187
      %p199 = scmp.eq.s32.totalorder %s30, 1
      %p200 = por %p198, %p199
      %p202 = scmp.ne.s32.totalorder %s187, %s201
      %p203 = scmp.eq.s32.totalorder %s30, 0
      %p204 = por %p202, %p203
      %s205 = ssub.s32 %s24, %s31
      %p206 = scmp.eq.s32.totalorder %s205, 0
      %s208 = sadd.s32 %s207, 1
      %s209 = scalar_select %p206, %s207, %s208
      %p212 = pneg %p206
      %p213 = scmp.eq.s32.totalorder %s24, 1
      %p214 = por %p212, %p213
      %p215 = scmp.ne.s32.totalorder %s207, %s210
      %p216 = scmp.eq.s32.totalorder %s24, 0
      %p217 = por %p215, %p216
      %p218 = scmp.ne.s32.totalorder %s207, %s210
      %p219 = scmp.eq.s32.totalorder %s29, 1
      %p220 = por %p218, %p219
      %p221 = scmp.ne.s32.totalorder %s210, %s211
      %p222 = scmp.eq.s32.totalorder %s29, 0
      %p223 = por %p221, %p222
      %p224 = scmp.ne.s32.totalorder %s210, %s211
      %p225 = scmp.eq.s32.totalorder %s30, 1
      %p226 = por %p224, %p225
      %p228 = scmp.ne.s32.totalorder %s211, %s227
      %p229 = scmp.eq.s32.totalorder %s30, 0
      %p230 = por %p228, %p229
      %p231 = scmp.le.s32.totalorder 1, %s24
      %p232 = scmp.lt.s32.totalorder %s24, 3
      %p233 = pnand %p231, %p232
      %p234 = pneg %p233
      // Predicated region
      $region9: #{tpu_custom_call.1} parent=5 // pred_check
        _
      $region10: #{tpu_custom_call.1} parent=5 // pred_check_branch
        %236 = sbr.rel (%p233) target = $region12
      $region11: #{tpu_custom_call.1} parent=5 // pred_region
        %s237 = ssub.s32 %s24, 1
        // Predicated region
        $region13: #{tpu_custom_call.1} parent=11 // pred_check
          %p238 = pneg %p71
        $region14: #{tpu_custom_call.1} parent=11 // pred_check_branch
          %240 = sbr.rel (%p238) target = $region16
        $region15: #{tpu_custom_call.1} parent=11 // pred_region
          %s242 = ssub.s32 128, 128
          %243 = vsyncadd [#allocation8], %s242
          %s244 = sshll.u32 [#allocation7], 4
          %s245 = int_to_ptr.vmem [resolvable:$true] %s244
          %250 = dma.hbm_to_vmem [thread:$0]  %s1, 128, %s245, [#allocation8], 64, 64, 4
        $region16: #{tpu_custom_call.1} parent=11 // pred_fallthru
          _
        // Predicated region
        $region17: #{tpu_custom_call.1} parent=11 // pred_check
          %p251 = pneg %p92
        $region18: #{tpu_custom_call.1} parent=11 // pred_check_branch
          %253 = sbr.rel (%p251) target = $region20
        $region19: #{tpu_custom_call.1} parent=11 // pred_region
          %s255 = ssub.s32 576, 576
          %256 = vsyncadd [#allocation8], %s255
          %s257 = sshll.u32 [#allocation9], 4
          %s258 = int_to_ptr.vmem [resolvable:$true] %s257
          %263 = dma.hbm_to_vmem [thread:$0]  %s2, 576, %s258, [#allocation8], 64, 64, 4
        $region20: #{tpu_custom_call.1} parent=11 // pred_fallthru
          _
        // Predicated region
        $region21: #{tpu_custom_call.1} parent=11 // pred_check
          %p264 = pneg %p113
        $region22: #{tpu_custom_call.1} parent=11 // pred_check_branch
          %266 = sbr.rel (%p264) target = $region24
        $region23: #{tpu_custom_call.1} parent=11 // pred_region
          %s268 = ssub.s32 64, 64
          %269 = vsyncadd [#allocation11], %s268
          %s271 = sshll.u32 [#allocation10], 4
          %s272 = int_to_ptr.vmem [resolvable:$true] %s271
          %274 = dma.hbm_to_vmem [thread:$0]  %s3, 64, %s272, [#allocation11]
        $region24: #{tpu_custom_call.1} parent=11 // pred_fallthru
          _
        // Predicated region
        $region25: #{tpu_custom_call.1} parent=11 // pred_check
          %p275 = pneg %p134
        $region26: #{tpu_custom_call.1} parent=11 // pred_check_branch
          %277 = sbr.rel (%p275) target = $region28
        $region27: #{tpu_custom_call.1} parent=11 // pred_region
          %s279 = ssub.s32 16, 16
          %280 = vsyncadd [#allocation11], %s279
          %s282 = sshll.u32 [#allocation12], 4
          %s283 = int_to_ptr.vmem [resolvable:$true] %s282
          %285 = dma.hbm_to_vmem [thread:$0]  %s4, 16, %s283, [#allocation11]
        $region28: #{tpu_custom_call.1} parent=11 // pred_fallthru
          _
        // Predicated region
        $region29: #{tpu_custom_call.1} parent=11 // pred_check
          %p286 = pneg %p155
        $region30: #{tpu_custom_call.1} parent=11 // pred_check_branch
          %288 = sbr.rel (%p286) target = $region32
        $region31: #{tpu_custom_call.1} parent=11 // pred_region
          %s290 = ssub.s32 16, 16
          %291 = vsyncadd [#allocation14], %s290
          %s293 = sshll.u32 [#allocation13], 4
          %s294 = int_to_ptr.vmem [resolvable:$true] %s293
          %296 = dma.hbm_to_vmem [thread:$0]  %s5, 16, %s294, [#allocation14]
        $region32: #{tpu_custom_call.1} parent=11 // pred_fallthru
          _
        // Predicated region
        $region33: #{tpu_custom_call.1} parent=11 // pred_check
          %p297 = pneg %p176
        $region34: #{tpu_custom_call.1} parent=11 // pred_check_branch
          %299 = sbr.rel (%p297) target = $region36
        $region35: #{tpu_custom_call.1} parent=11 // pred_region
          %s301 = ssub.s32 16, 16
          %302 = vsyncadd [#allocation14], %s301
          %s304 = sshll.u32 [#allocation15], 4
          %s305 = int_to_ptr.vmem [resolvable:$true] %s304
          %307 = dma.hbm_to_vmem [thread:$0]  %s6, 16, %s305, [#allocation14]
        $region36: #{tpu_custom_call.1} parent=11 // pred_fallthru
          _
        // Predicated region
        $region37: #{tpu_custom_call.1} parent=11 // pred_check
          %p308 = pneg %p197
        $region38: #{tpu_custom_call.1} parent=11 // pred_check_branch
          %310 = sbr.rel (%p308) target = $region40
        $region39: #{tpu_custom_call.1} parent=11 // pred_region
          %s312 = ssub.s32 16, 16
          %313 = vsyncadd [#allocation17], %s312
          %s315 = sshll.u32 [#allocation16], 4
          %s316 = int_to_ptr.vmem [resolvable:$true] %s315
          %318 = dma.hbm_to_vmem [thread:$0]  %s7, 16, %s316, [#allocation17]
        $region40: #{tpu_custom_call.1} parent=11 // pred_fallthru
          _
      $region12: #{tpu_custom_call.1} parent=5 // pred_fallthru
        _
      %p319 = scmp.lt.s32.totalorder %s24, 2
      // Predicated region
      $region41: #{tpu_custom_call.1} parent=5 // pred_check
        %p320 = pneg %p319
      $region42: #{tpu_custom_call.1} parent=5 // pred_check_branch
        %322 = sbr.rel (%p320) target = $region44
      $region43: #{tpu_custom_call.1} parent=5 // pred_region
        // Predicated region
        $region45: #{tpu_custom_call.1} parent=43 // pred_check
          %p323 = pneg %p44
        $region46: #{tpu_custom_call.1} parent=43 // pred_check_branch
          %325 = sbr.rel (%p323) target = $region48
        $region47: #{tpu_custom_call.1} parent=43 // pred_region
          %s326 = sand.u32 %s34, 1
          %s327 = scalar_lea.sflag [#allocation5], %s326
          %s328 = sand.u32 %s34, 1
          %s329 = smul.addr %s328, 32
          %s330 = scalar_lea.vmem [#allocation4], %s329
          %s332 = ssub.s32 512, 512
          %333 = vsyncadd %s327, %s332
          %s334 = smul.addr %s24, 8
          %s335 = smul.addr %s334, 64
          %s336 = scalar_lea.hbm %s0, %s335
          %s337 = sshll.u32 %s330, 4
          %s338 = int_to_ptr.vmem [resolvable:$true] %s337
          %343 = dma.hbm_to_vmem [thread:$0]  %s336, 512, %s338, %s327, 64, 64, 4
        $region48: #{tpu_custom_call.1} parent=43 // pred_fallthru
          _
      $region44: #{tpu_custom_call.1} parent=5 // pred_fallthru
        _
      %p344 = scmp.le.s32.totalorder 1, %s24
      %p345 = scmp.lt.s32.totalorder %s24, 3
      %p346 = pnand %p344, %p345
      %p347 = pneg %p346
      // Predicated region
      $region49: #{tpu_custom_call.1} parent=5 // pred_check
        _
      $region50: #{tpu_custom_call.1} parent=5 // pred_check_branch
        %349 = sbr.rel (%p346) target = $region52
      $region51: #{tpu_custom_call.1} parent=5 // pred_region
        %s350 = ssub.s32 %s24, 1
        %s351 = sand.u32 %s37, 1
        %s352 = scalar_lea.sflag [#allocation5], %s351
        %s353 = sand.u32 %s37, 1
        %s354 = smul.addr %s353, 32
        %s355 = scalar_lea.vmem [#allocation4], %s354
        // Predicated region
        $region53: #{tpu_custom_call.1} parent=51 // pred_check
          %p356 = pneg %p50
        $region54: #{tpu_custom_call.1} parent=51 // pred_check_branch
          %358 = sbr.rel (%p356) target = $region56
        $region55: #{tpu_custom_call.1} parent=51 // pred_region
          %359 = dma.done %s352, 512
        $region56: #{tpu_custom_call.1} parent=51 // pred_fallthru
          _
        // Predicated region
        $region57: #{tpu_custom_call.1} parent=51 // pred_check
          %p360 = pneg %p71
        $region58: #{tpu_custom_call.1} parent=51 // pred_check_branch
          %362 = sbr.rel (%p360) target = $region60
        $region59: #{tpu_custom_call.1} parent=51 // pred_region
          %363 = dma.done [#allocation8], 128
        $region60: #{tpu_custom_call.1} parent=51 // pred_fallthru
          _
        // Predicated region
        $region61: #{tpu_custom_call.1} parent=51 // pred_check
          %p364 = pneg %p92
        $region62: #{tpu_custom_call.1} parent=51 // pred_check_branch
          %366 = sbr.rel (%p364) target = $region64
        $region63: #{tpu_custom_call.1} parent=51 // pred_region
          %367 = dma.done [#allocation8], 576
        $region64: #{tpu_custom_call.1} parent=51 // pred_fallthru
          _
        // Predicated region
        $region65: #{tpu_custom_call.1} parent=51 // pred_check
          %p368 = pneg %p113
        $region66: #{tpu_custom_call.1} parent=51 // pred_check_branch
          %370 = sbr.rel (%p368) target = $region68
        $region67: #{tpu_custom_call.1} parent=51 // pred_region
          %371 = dma.done [#allocation11], 64
        $region68: #{tpu_custom_call.1} parent=51 // pred_fallthru
          _
        // Predicated region
        $region69: #{tpu_custom_call.1} parent=51 // pred_check
          %p372 = pneg %p134
        $region70: #{tpu_custom_call.1} parent=51 // pred_check_branch
          %374 = sbr.rel (%p372) target = $region72
        $region71: #{tpu_custom_call.1} parent=51 // pred_region
          %375 = dma.done [#allocation11], 16
        $region72: #{tpu_custom_call.1} parent=51 // pred_fallthru
          _
        // Predicated region
        $region73: #{tpu_custom_call.1} parent=51 // pred_check
          %p376 = pneg %p155
        $region74: #{tpu_custom_call.1} parent=51 // pred_check_branch
          %378 = sbr.rel (%p376) target = $region76
        $region75: #{tpu_custom_call.1} parent=51 // pred_region
          %379 = dma.done [#allocation14], 16
        $region76: #{tpu_custom_call.1} parent=51 // pred_fallthru
          _
        // Predicated region
        $region77: #{tpu_custom_call.1} parent=51 // pred_check
          %p380 = pneg %p176
        $region78: #{tpu_custom_call.1} parent=51 // pred_check_branch
          %382 = sbr.rel (%p380) target = $region80
        $region79: #{tpu_custom_call.1} parent=51 // pred_region
          %383 = dma.done [#allocation14], 16
        $region80: #{tpu_custom_call.1} parent=51 // pred_fallthru
          _
        // Predicated region
        $region81: #{tpu_custom_call.1} parent=51 // pred_check
          %p384 = pneg %p197
        $region82: #{tpu_custom_call.1} parent=51 // pred_check_branch
          %386 = sbr.rel (%p384) target = $region84
        $region83: #{tpu_custom_call.1} parent=51 // pred_region
          %387 = dma.done [#allocation17], 16
        $region84: #{tpu_custom_call.1} parent=51 // pred_fallthru
          _
        %s388 = sand.u32 %s37, 1
        %s389 = scalar_lea.sflag [#allocation5], %s388
        %s390 = sand.u32 %s37, 1
        %s391 = smul.addr %s390, 32
        %s392 = scalar_lea.vmem [#allocation4], %s391
        %p393 = pneg %p50
        %p394 = pneg %p47
        %p395 = pneg %p71
        %p396 = pneg %p68
        %p397 = pneg %p92
        %p398 = pneg %p89
        %p399 = pneg %p113
        %p400 = pneg %p110
        %p401 = pneg %p134
        %p402 = pneg %p131
        %p403 = pneg %p155
        %p404 = pneg %p152
        %p405 = pneg %p176
        %p406 = pneg %p173
        %p407 = pneg %p197
        %p408 = pneg %p194
        %p409 = pneg %p223
        %p410 = pneg %p220
        %s411 = sand.u32 %s210, 1
        %s412 = scalar_lea.sflag [#allocation6], %s411
        %s413 = sand.u32 %s210, 1
        %s414 = smul.addr %s413, 64
        %s415 = scalar_lea.vmem [#allocation18], %s414
        %v417 = vld [vmem:[%s355] sm:$0xf]
        %v418 = vld [vmem:[%s355 + $0x4] sm:$0xf]
        %v419 = vld [vmem:[%s355 + $0x8] sm:$0xf]
        %v420 = vld [vmem:[%s355 + $0xc] sm:$0xf]
        %v421 = vld [vmem:[%s355 + $0x10] sm:$0xf]
        %v422 = vld [vmem:[%s355 + $0x14] sm:$0xf]
        %v423 = vld [vmem:[%s355 + $0x18] sm:$0xf]
        %v424 = vld [vmem:[%s355 + $0x1c] sm:$0xf]
        %v425 = vld [vmem:[#allocation7] sm:$0xf]
        %v426 = vld [vmem:[#allocation7 + $0x4] sm:$0xf]
        %v435 = vunpack.c.l.b16 %v417
        %v436 = vunpack.c.l.b16 %v418
        %v437 = vunpack.c.l.b16 %v419
        %v438 = vunpack.c.l.b16 %v420
        %v439 = vunpack.c.l.b16 %v421
        %v440 = vunpack.c.l.b16 %v422
        %v441 = vunpack.c.l.b16 %v423
        %v442 = vunpack.c.l.b16 %v424
        %v443 = vpack.c.b16 %v436, %v435
        %v444 = vpack.c.b16 %v438, %v437
        %v445 = vpack.c.b16 %v440, %v439
        %v446 = vpack.c.b16 %v442, %v441
        %v449 = vunpack.c.l.b16 %v425
        %v450 = vunpack.c.l.b16 %v426
        %v451 = vpack.c.b16 %v450, %v449
        %vm453 = vcmask 130048
        %v455 = vsel %vm453, %v443, 0
        %v458 = vsel %vm453, %v444, 0
        %v461 = vsel %vm453, %v445, 0
        %v464 = vsel %vm453, %v446, 0
        %466 = vmatprep.subr.bf16.mxu0 0
        %467 = vmatpush1.bf16.msra.mxu0 %v451
        %468 = vmatprep.subr.bf16.mxu0 0
        %469 = vmatpush1.bf16.msra.mxu0 0
        %470 = vmatprep.subr.bf16.mxu0 0
        %471 = vmatpush1.bf16.msra.mxu0 0
        %472 = vmatprep.subr.bf16.mxu0 0
        %473 = vmatpush1.bf16.msra.mxu0 0
        %474 = vmatprep.subr.bf16.mxu0 0
        %475 = vmatpush1.bf16.msra.mxu0 0
        %476 = vmatprep.subr.bf16.mxu0 0
        %477 = vmatpush1.bf16.msra.mxu0 0
        %478 = vmatprep.subr.bf16.mxu0 0
        %479 = vmatpush1.bf16.msra.mxu0 0
        %480 = vmatprep.subr.bf16.mxu0 0
        %481 = vmatpush1.bf16.msra.mxu0 0
        %482 = vmatprep.subr.bf16.mxu0 0
        %483 = vmatpush1.bf16.msra.mxu0 0
        %484 = vmatprep.subr.bf16.mxu0 0
        %485 = vmatpush1.bf16.msra.mxu0 0
        %486 = vmatprep.subr.bf16.mxu0 0
        %487 = vmatpush1.bf16.msra.mxu0 0
        %488 = vmatprep.subr.bf16.mxu0 0
        %489 = vmatpush1.bf16.msra.mxu0 0
        %490 = vmatprep.subr.bf16.mxu0 0
        %491 = vmatpush1.bf16.msra.mxu0 0
        %492 = vmatprep.subr.bf16.mxu0 0
        %493 = vmatpush1.bf16.msra.mxu0 0
        %494 = vmatprep.subr.bf16.mxu0 0
        %495 = vmatpush1.bf16.msra.mxu0 0
        %496 = vmatprep.subr.bf16.mxu0 0
        %497 = vmatpush1.bf16.msra.mxu0 0
        %498 = vmatprep.mubr.bf16.mxu0 0
        %499 = vmatmul.mubr.bf16.gmra.mrb[0].mxu0 %v455
        %v500 = vpop.f32.mrb[0].mxu0
        %v501 = vadd.f32 0.0, %v500
        %v502 = vpop.f32.mrb[0].mxu0
        %v503 = vpop.f32.mrb[0].mxu0
        %v504 = vadd.f32 0.0, %v503
        %v505 = vpop.f32.mrb[0].mxu0
        %506 = vmatprep.mubr.bf16.mxu0 0
        %507 = vmatmul.mubr.bf16.gmra.mrb[0].mxu0 %v458
        %v508 = vpop.f32.mrb[0].mxu0
        %v509 = vadd.f32 0.0, %v508
        %v510 = vpop.f32.mrb[0].mxu0
        %v511 = vpop.f32.mrb[0].mxu0
        %v512 = vadd.f32 0.0, %v511
        %v513 = vpop.f32.mrb[0].mxu0
        %514 = vmatprep.mubr.bf16.mxu0 0
        %515 = vmatmul.mubr.bf16.gmra.mrb[0].mxu0 %v461
        %v516 = vpop.f32.mrb[0].mxu0
        %v517 = vadd.f32 0.0, %v516
        %v518 = vpop.f32.mrb[0].mxu0
        %v519 = vpop.f32.mrb[0].mxu0
        %v520 = vadd.f32 0.0, %v519
        %v521 = vpop.f32.mrb[0].mxu0
        %522 = vmatprep.mubr.bf16.mxu0 0
        %523 = vmatmul.mubr.bf16.gmra.mrb[0].mxu0 %v464
        %v524 = vpop.f32.mrb[0].mxu0
        %v525 = vadd.f32 0.0, %v524
        %v526 = vpop.f32.mrb[0].mxu0
        %v527 = vpop.f32.mrb[0].mxu0
        %v528 = vadd.f32 0.0, %v527
        %v529 = vpop.f32.mrb[0].mxu0
        %530 = vdwg.mxu0
        %v531 = vld [vmem:[#allocation16] sm:$0x1]
        %v533 = vlaneseq
        %v534 = vshrl.u32 %v533, 7
        %v535 = vsub.s32 0, %v534
        %v536 = vrot.slane %v531, %v535
        %v538 = vadd.f32 %v501, %v536
        %v539 = vadd.f32 %v504, %v536
        %v540 = vadd.f32 %v509, %v536
        %v541 = vadd.f32 %v512, %v536
        %v542 = vadd.f32 %v517, %v536
        %v543 = vadd.f32 %v520, %v536
        %v544 = vadd.f32 %v525, %v536
        %v545 = vadd.f32 %v528, %v536
        %vm546 = vcmask 261120
        %547 = vst.msk [vmem:[%s415] sm:$0xff] %vm546, %v538
        %548 = vst.msk [vmem:[%s415 + $0x8] sm:$0xff] %vm546, %v539
        %549 = vst.msk [vmem:[%s415 + $0x10] sm:$0xff] %vm546, %v540
        %550 = vst.msk [vmem:[%s415 + $0x18] sm:$0xff] %vm546, %v541
        %551 = vst.msk [vmem:[%s415 + $0x20] sm:$0xff] %vm546, %v542
        %552 = vst.msk [vmem:[%s415 + $0x28] sm:$0xff] %vm546, %v543
        %553 = vst.msk [vmem:[%s415 + $0x30] sm:$0xff] %vm546, %v544
        %554 = vst.msk [vmem:[%s415 + $0x38] sm:$0xff] %vm546, %v545
        %v555 = vld [vmem:[#allocation12] sm:$0x1]
        %v557 = vlaneseq
        %v558 = vshrl.u32 %v557, 7
        %v559 = vsub.s32 0, %v558
        %v560 = vrot.slane %v555, %v559
        %561 = vrot.lane.b32.xlu0 %v560, 32
        %v562 = vpop.permute.xlu0 %561
        %v564 = vadd.f32 %v501, %v562
        %v565 = vadd.f32 %v504, %v562
        %v566 = vadd.f32 %v509, %v562
        %v567 = vadd.f32 %v512, %v562
        %v568 = vadd.f32 %v517, %v562
        %v569 = vadd.f32 %v520, %v562
        %v570 = vadd.f32 %v525, %v562
        %v571 = vadd.f32 %v528, %v562
        %v572 = vmul.f32 %v564, 0.01
        %v573 = vmul.f32 %v565, 0.01
        %v574 = vmul.f32 %v566, 0.01
        %v575 = vmul.f32 %v567, 0.01
        %v576 = vmul.f32 %v568, 0.01
        %v577 = vmul.f32 %v569, 0.01
        %v578 = vmul.f32 %v570, 0.01
        %v579 = vmul.f32 %v571, 0.01
        %v580 = vmax.f32 %v564, %v572
        %v581 = vmax.f32 %v565, %v573
        %v582 = vmax.f32 %v566, %v574
        %v583 = vmax.f32 %v567, %v575
        %v584 = vmax.f32 %v568, %v576
        %v585 = vmax.f32 %v569, %v577
        %v586 = vmax.f32 %v570, %v578
        %v587 = vmax.f32 %v571, %v579
        %vm588 = vcmask 60416
        %589 = vst.msk [vmem:[#allocation2] sm:$0xf] %vm588, 0
        %vm590 = vcmask 57344
        %591 = vst.msk [vmem:[#allocation2 + $0x4] sm:$0x1] %vm590, 0
        %s592 = scalar_lea.vmem [#allocation2], 72
        %593 = vst.msk [vmem:[%s592] sm:$0xf] %vm588, 0
        %594 = vst.msk [vmem:[%s592 + $0x4] sm:$0x1] %vm590, 0
        %vm595 = vcmask 57344
        %vm596 = vsmask.f32 256
        %vm597 = vmand %vm595, %vm596
        %v598 = vld [vmem:[#allocation2] sm:$0x1]
        %v599 = vsel %vm597, 0, %v598
        %600 = vst [vmem:[#allocation2] sm:$0x1] %v599
        %v601 = vld [vmem:[#allocation2 + $0x8] sm:$0x1]
        %v602 = vsel %vm597, 0, %v601
        %603 = vst [vmem:[#allocation2 + $0x8] sm:$0x1] %v602
        %v604 = vld [vmem:[#allocation2 + $0x10] sm:$0x1]
        %v605 = vsel %vm597, 0, %v604
        %606 = vst [vmem:[#allocation2 + $0x10] sm:$0x1] %v605
        %v607 = vld [vmem:[#allocation2 + $0x18] sm:$0x1]
        %v608 = vsel %vm597, 0, %v607
        %609 = vst [vmem:[#allocation2 + $0x18] sm:$0x1] %v608
        %v610 = vld [vmem:[#allocation2 + $0x20] sm:$0x1]
        %v611 = vsel %vm597, 0, %v610
        %612 = vst [vmem:[#allocation2 + $0x20] sm:$0x1] %v611
        %v613 = vld [vmem:[#allocation2 + $0x28] sm:$0x1]
        %v614 = vsel %vm597, 0, %v613
        %615 = vst [vmem:[#allocation2 + $0x28] sm:$0x1] %v614
        %v616 = vld [vmem:[#allocation2 + $0x30] sm:$0x1]
        %v617 = vsel %vm597, 0, %v616
        %618 = vst [vmem:[#allocation2 + $0x30] sm:$0x1] %v617
        %v619 = vld [vmem:[#allocation2 + $0x38] sm:$0x1]
        %v620 = vsel %vm597, 0, %v619
        %621 = vst [vmem:[#allocation2 + $0x38] sm:$0x1] %v620
        %v622 = vld [vmem:[#allocation2 + $0x40] sm:$0x1]
        %v623 = vsel %vm597, 0, %v622
        %624 = vst [vmem:[#allocation2 + $0x40] sm:$0x1] %v623
        %v625 = vld [vmem:[#allocation2 + $0x48] sm:$0x1]
        %v626 = vsel %vm597, 0, %v625
        %627 = vst [vmem:[#allocation2 + $0x48] sm:$0x1] %v626
        %vm628 = vsmask.f32 7938
        %vm629 = vmand %vm595, %vm628
        %v630 = vld [vmem:[#allocation2 + $0x4] sm:$0x1]
        %v631 = vsel %vm629, 0, %v630
        %632 = vst [vmem:[#allocation2 + $0x4] sm:$0x1] %v631
        %v633 = vld [vmem:[#allocation2 + $0xc] sm:$0x1]
        %v634 = vsel %vm629, 0, %v633
        %635 = vst [vmem:[#allocation2 + $0xc] sm:$0x1] %v634
        %v636 = vld [vmem:[#allocation2 + $0x14] sm:$0x1]
        %v637 = vsel %vm629, 0, %v636
        %638 = vst [vmem:[#allocation2 + $0x14] sm:$0x1] %v637
        %v639 = vld [vmem:[#allocation2 + $0x1c] sm:$0x1]
        %v640 = vsel %vm629, 0, %v639
        %641 = vst [vmem:[#allocation2 + $0x1c] sm:$0x1] %v640
        %v642 = vld [vmem:[#allocation2 + $0x24] sm:$0x1]
        %v643 = vsel %vm629, 0, %v642
        %644 = vst [vmem:[#allocation2 + $0x24] sm:$0x1] %v643
        %v645 = vld [vmem:[#allocation2 + $0x2c] sm:$0x1]
        %v646 = vsel %vm629, 0, %v645
        %647 = vst [vmem:[#allocation2 + $0x2c] sm:$0x1] %v646
        %v648 = vld [vmem:[#allocation2 + $0x34] sm:$0x1]
        %v649 = vsel %vm629, 0, %v648
        %650 = vst [vmem:[#allocation2 + $0x34] sm:$0x1] %v649
        %v651 = vld [vmem:[#allocation2 + $0x3c] sm:$0x1]
        %v652 = vsel %vm629, 0, %v651
        %653 = vst [vmem:[#allocation2 + $0x3c] sm:$0x1] %v652
        %v654 = vld [vmem:[#allocation2 + $0x44] sm:$0x1]
        %v655 = vsel %vm629, 0, %v654
        %656 = vst [vmem:[#allocation2 + $0x44] sm:$0x1] %v655
        %v657 = vld [vmem:[#allocation2 + $0x4c] sm:$0x1]
        %v658 = vsel %vm629, 0, %v657
        %659 = vst [vmem:[#allocation2 + $0x4c] sm:$0x1] %v658
        %v660 = vpack.c.bf16 %v581, %v580
        %v661 = vpack.c.bf16 %v583, %v582
        %v662 = vpack.c.bf16 %v585, %v584
        %v663 = vpack.c.bf16 %v587, %v586
        %v668 = vunpack.c.l.b16 %v660
        %v669 = vunpack.c.h.b16 %v660
        %v670 = vunpack.c.l.b16 %v661
        %v671 = vunpack.c.h.b16 %v661
        %v672 = vunpack.c.l.b16 %v662
        %v673 = vunpack.c.h.b16 %v662
        %v674 = vunpack.c.l.b16 %v663
        %v675 = vunpack.c.h.b16 %v663
        %v676 = vpack.c.b16 %v668, %v668
        %v677 = vpack.c.b16 %v669, %v669
        %v678 = vpack.c.b16 %v670, %v670
        %v679 = vpack.c.b16 %v671, %v671
        %v680 = vpack.c.b16 %v672, %v672
        %v681 = vpack.c.b16 %v673, %v673
        %v682 = vpack.c.b16 %v674, %v674
        %v683 = vpack.c.b16 %v675, %v675
        %v685 = vshrl.u32 %v676, 16
        %v687 = vrot.slane %v685, 7
        %v688 = vshll.u32 %v676, 16
        %v690 = vor.u32 %v687, %v688
        %v691 = vrot.slane %v687, 4
        %v693 = vshrl.u32 %v677, 16
        %v695 = vrot.slane %v693, 7
        %v696 = vshll.u32 %v677, 16
        %v698 = vor.u32 %v695, %v696
        %v699 = vrot.slane %v695, 4
        %v701 = vshrl.u32 %v678, 16
        %v703 = vrot.slane %v701, 7
        %v704 = vshll.u32 %v678, 16
        %v706 = vor.u32 %v703, %v704
        %v707 = vrot.slane %v703, 4
        %v709 = vshrl.u32 %v679, 16
        %v711 = vrot.slane %v709, 7
        %v712 = vshll.u32 %v679, 16
        %v714 = vor.u32 %v711, %v712
        %v715 = vrot.slane %v711, 4
        %v717 = vshrl.u32 %v680, 16
        %v719 = vrot.slane %v717, 7
        %v720 = vshll.u32 %v680, 16
        %v722 = vor.u32 %v719, %v720
        %v723 = vrot.slane %v719, 4
        %v725 = vshrl.u32 %v681, 16
        %v727 = vrot.slane %v725, 7
        %v728 = vshll.u32 %v681, 16
        %v730 = vor.u32 %v727, %v728
        %v731 = vrot.slane %v727, 4
        %v733 = vshrl.u32 %v682, 16
        %v735 = vrot.slane %v733, 7
        %v736 = vshll.u32 %v682, 16
        %v738 = vor.u32 %v735, %v736
        %v739 = vrot.slane %v735, 4
        %v741 = vshrl.u32 %v683, 16
        %v743 = vrot.slane %v741, 7
        %v744 = vshll.u32 %v683, 16
        %v746 = vor.u32 %v743, %v744
        %v747 = vrot.slane %v743, 4
        %748 = vrot.lane.b32.xlu0 %v690, 96
        %v749 = vpop.permute.xlu0 %748
        %750 = vrot.lane.b32.xlu0 %v691, 96
        %v751 = vpop.permute.xlu0 %750
        %752 = vrot.lane.b32.xlu0 %v698, 96
        %v753 = vpop.permute.xlu0 %752
        %754 = vrot.lane.b32.xlu0 %v699, 96
        %v755 = vpop.permute.xlu0 %754
        %756 = vrot.lane.b32.xlu0 %v706, 96
        %v757 = vpop.permute.xlu0 %756
        %758 = vrot.lane.b32.xlu0 %v707, 96
        %v759 = vpop.permute.xlu0 %758
        %760 = vrot.lane.b32.xlu0 %v714, 96
        %v761 = vpop.permute.xlu0 %760
        %762 = vrot.lane.b32.xlu0 %v715, 96
        %v763 = vpop.permute.xlu0 %762
        %764 = vrot.lane.b32.xlu0 %v722, 96
        %v765 = vpop.permute.xlu0 %764
        %766 = vrot.lane.b32.xlu0 %v723, 96
        %v767 = vpop.permute.xlu0 %766
        %768 = vrot.lane.b32.xlu0 %v730, 96
        %v769 = vpop.permute.xlu0 %768
        %770 = vrot.lane.b32.xlu0 %v731, 96
        %v771 = vpop.permute.xlu0 %770
        %772 = vrot.lane.b32.xlu0 %v738, 96
        %v773 = vpop.permute.xlu0 %772
        %774 = vrot.lane.b32.xlu0 %v739, 96
        %v775 = vpop.permute.xlu0 %774
        %776 = vrot.lane.b32.xlu0 %v746, 96
        %v777 = vpop.permute.xlu0 %776
        %778 = vrot.lane.b32.xlu0 %v747, 96
        %v779 = vpop.permute.xlu0 %778
        %s796 = scalar_lea.vmem [#allocation2], 8
        %vm797 = vcmask 60416
        %vm798 = vmand %vm797, %vm628
        %v799 = vld [vmem:[%s796] sm:$0xf]
        %v800 = vsel %vm798, %v749, %v799
        %801 = vst [vmem:[%s796] sm:$0xf] %v800
        %v802 = vld [vmem:[%s796 + $0x4] sm:$0x1]
        %v803 = vsel %vm597, %v751, %v802
        %804 = vst [vmem:[%s796 + $0x4] sm:$0x1] %v803
        %v805 = vld [vmem:[%s796 + $0x8] sm:$0xf]
        %v806 = vsel %vm798, %v753, %v805
        %807 = vst [vmem:[%s796 + $0x8] sm:$0xf] %v806
        %v808 = vld [vmem:[%s796 + $0xc] sm:$0x1]
        %v809 = vsel %vm597, %v755, %v808
        %810 = vst [vmem:[%s796 + $0xc] sm:$0x1] %v809
        %v811 = vld [vmem:[%s796 + $0x10] sm:$0xf]
        %v812 = vsel %vm798, %v757, %v811
        %813 = vst [vmem:[%s796 + $0x10] sm:$0xf] %v812
        %v814 = vld [vmem:[%s796 + $0x14] sm:$0x1]
        %v815 = vsel %vm597, %v759, %v814
        %816 = vst [vmem:[%s796 + $0x14] sm:$0x1] %v815
        %v817 = vld [vmem:[%s796 + $0x18] sm:$0xf]
        %v818 = vsel %vm798, %v761, %v817
        %819 = vst [vmem:[%s796 + $0x18] sm:$0xf] %v818
        %v820 = vld [vmem:[%s796 + $0x1c] sm:$0x1]
        %v821 = vsel %vm597, %v763, %v820
        %822 = vst [vmem:[%s796 + $0x1c] sm:$0x1] %v821
        %v823 = vld [vmem:[%s796 + $0x20] sm:$0xf]
        %v824 = vsel %vm798, %v765, %v823
        %825 = vst [vmem:[%s796 + $0x20] sm:$0xf] %v824
        %v826 = vld [vmem:[%s796 + $0x24] sm:$0x1]
        %v827 = vsel %vm597, %v767, %v826
        %828 = vst [vmem:[%s796 + $0x24] sm:$0x1] %v827
        %v829 = vld [vmem:[%s796 + $0x28] sm:$0xf]
        %v830 = vsel %vm798, %v769, %v829
        %831 = vst [vmem:[%s796 + $0x28] sm:$0xf] %v830
        %v832 = vld [vmem:[%s796 + $0x2c] sm:$0x1]
        %v833 = vsel %vm597, %v771, %v832
        %834 = vst [vmem:[%s796 + $0x2c] sm:$0x1] %v833
        %v835 = vld [vmem:[%s796 + $0x30] sm:$0xf]
        %v836 = vsel %vm798, %v773, %v835
        %837 = vst [vmem:[%s796 + $0x30] sm:$0xf] %v836
        %v838 = vld [vmem:[%s796 + $0x34] sm:$0x1]
        %v839 = vsel %vm597, %v775, %v838
        %840 = vst [vmem:[%s796 + $0x34] sm:$0x1] %v839
        %v841 = vld [vmem:[%s796 + $0x38] sm:$0xf]
        %v842 = vsel %vm798, %v777, %v841
        %843 = vst [vmem:[%s796 + $0x38] sm:$0xf] %v842
        %v844 = vld [vmem:[%s796 + $0x3c] sm:$0x1]
        %v845 = vsel %vm597, %v779, %v844
        %846 = vst [vmem:[%s796 + $0x3c] sm:$0x1] %v845
        %v847 = vld [vmem:[#allocation2] sm:$0xf]
        %v848 = vld [vmem:[#allocation2 + $0x8] sm:$0xf]
        %v849 = vld [vmem:[#allocation2 + $0x10] sm:$0xf]
        %v850 = vld [vmem:[#allocation2 + $0x18] sm:$0xf]
        %v851 = vld [vmem:[#allocation2 + $0x20] sm:$0xf]
        %v852 = vld [vmem:[#allocation2 + $0x28] sm:$0xf]
        %v853 = vld [vmem:[#allocation2 + $0x30] sm:$0xf]
        %v854 = vld [vmem:[#allocation2 + $0x38] sm:$0xf]
        %v863 = vunpack.c.l.b16 %v847
        %v864 = vunpack.c.l.b16 %v848
        %v865 = vunpack.c.l.b16 %v849
        %v866 = vunpack.c.l.b16 %v850
        %v867 = vunpack.c.l.b16 %v851
        %v868 = vunpack.c.l.b16 %v852
        %v869 = vunpack.c.l.b16 %v853
        %v870 = vunpack.c.l.b16 %v854
        %v871 = vpack.c.b16 %v864, %v863
        %v872 = vpack.c.b16 %v866, %v865
        %v873 = vpack.c.b16 %v868, %v867
        %v874 = vpack.c.b16 %v870, %v869
        %vm879 = vcmask 64512
        %880 = vst.msk [vmem:[#allocation3] sm:$0xff] %vm879, %v871
        %881 = vst.msk [vmem:[#allocation3 + $0x8] sm:$0xff] %vm879, %v872
        %882 = vst.msk [vmem:[#allocation3 + $0x10] sm:$0xff] %vm879, %v873
        %883 = vst.msk [vmem:[#allocation3 + $0x18] sm:$0xff] %vm879, %v874
        %v884 = vld [vmem:[#allocation2] sm:$0xf]
        %v885 = vld [vmem:[#allocation2 + $0x4] sm:$0x1]
        %v886 = vld [vmem:[#allocation2 + $0x8] sm:$0xf]
        %v887 = vld [vmem:[#allocation2 + $0xc] sm:$0x1]
        %v888 = vld [vmem:[#allocation2 + $0x10] sm:$0xf]
        %v889 = vld [vmem:[#allocation2 + $0x14] sm:$0x1]
        %v890 = vld [vmem:[#allocation2 + $0x18] sm:$0xf]
        %v891 = vld [vmem:[#allocation2 + $0x1c] sm:$0x1]
        %v892 = vld [vmem:[#allocation2 + $0x20] sm:$0xf]
        %v893 = vld [vmem:[#allocation2 + $0x24] sm:$0x1]
        %v894 = vld [vmem:[#allocation2 + $0x28] sm:$0xf]
        %v895 = vld [vmem:[#allocation2 + $0x2c] sm:$0x1]
        %v896 = vld [vmem:[#allocation2 + $0x30] sm:$0xf]
        %v897 = vld [vmem:[#allocation2 + $0x34] sm:$0x1]
        %v898 = vld [vmem:[#allocation2 + $0x38] sm:$0xf]
        %v899 = vld [vmem:[#allocation2 + $0x3c] sm:$0x1]
        %vm900 = vsmask.f32 3328
        %vm901 = vsmask.f32 7440
        %vm902 = vmor %vm900, %vm901
        %v904 = vshrl.u32 %v884, 16
        %v906 = vrot.slane %v904, 4
        %v907 = vshll.u32 %v884, 16
        %v909 = vrot.slane %v907, 5
        %v910 = vor.u32 %v906, %v909
        %v911 = vrot.slane %v910, 4
        %v913 = vshll.u32 %v885, 16
        %v915 = vrot.slane %v913, 5
        %v916 = vsel %vm902, %v911, %v915
        %v918 = vshrl.u32 %v886, 16
        %v920 = vrot.slane %v918, 4
        %v921 = vshll.u32 %v886, 16
        %v923 = vrot.slane %v921, 5
        %v924 = vor.u32 %v920, %v923
        %v925 = vrot.slane %v924, 4
        %v927 = vshll.u32 %v887, 16
        %v929 = vrot.slane %v927, 5
        %v930 = vsel %vm902, %v925, %v929
        %v932 = vshrl.u32 %v888, 16
        %v934 = vrot.slane %v932, 4
        %v935 = vshll.u32 %v888, 16
        %v937 = vrot.slane %v935, 5
        %v938 = vor.u32 %v934, %v937
        %v939 = vrot.slane %v938, 4
        %v941 = vshll.u32 %v889, 16
        %v943 = vrot.slane %v941, 5
        %v944 = vsel %vm902, %v939, %v943
        %v946 = vshrl.u32 %v890, 16
        %v948 = vrot.slane %v946, 4
        %v949 = vshll.u32 %v890, 16
        %v951 = vrot.slane %v949, 5
        %v952 = vor.u32 %v948, %v951
        %v953 = vrot.slane %v952, 4
        %v955 = vshll.u32 %v891, 16
        %v957 = vrot.slane %v955, 5
        %v958 = vsel %vm902, %v953, %v957
        %v960 = vshrl.u32 %v892, 16
        %v962 = vrot.slane %v960, 4
        %v963 = vshll.u32 %v892, 16
        %v965 = vrot.slane %v963, 5
        %v966 = vor.u32 %v962, %v965
        %v967 = vrot.slane %v966, 4
        %v969 = vshll.u32 %v893, 16
        %v971 = vrot.slane %v969, 5
        %v972 = vsel %vm902, %v967, %v971
        %v974 = vshrl.u32 %v894, 16
        %v976 = vrot.slane %v974, 4
        %v977 = vshll.u32 %v894, 16
        %v979 = vrot.slane %v977, 5
        %v980 = vor.u32 %v976, %v979
        %v981 = vrot.slane %v980, 4
        %v983 = vshll.u32 %v895, 16
        %v985 = vrot.slane %v983, 5
        %v986 = vsel %vm902, %v981, %v985
        %v988 = vshrl.u32 %v896, 16
        %v990 = vrot.slane %v988, 4
        %v991 = vshll.u32 %v896, 16
        %v993 = vrot.slane %v991, 5
        %v994 = vor.u32 %v990, %v993
        %v995 = vrot.slane %v994, 4
        %v997 = vshll.u32 %v897, 16
        %v999 = vrot.slane %v997, 5
        %v1000 = vsel %vm902, %v995, %v999
        %v1002 = vshrl.u32 %v898, 16
        %v1004 = vrot.slane %v1002, 4
        %v1005 = vshll.u32 %v898, 16
        %v1007 = vrot.slane %v1005, 5
        %v1008 = vor.u32 %v1004, %v1007
        %v1009 = vrot.slane %v1008, 4
        %v1011 = vshll.u32 %v899, 16
        %v1013 = vrot.slane %v1011, 5
        %v1014 = vsel %vm902, %v1009, %v1013
        %v1015 = vunpack.c.l.b16 %v916
        %v1016 = vunpack.c.l.b16 %v930
        %v1017 = vunpack.c.l.b16 %v944
        %v1018 = vunpack.c.l.b16 %v958
        %v1019 = vunpack.c.l.b16 %v972
        %v1020 = vunpack.c.l.b16 %v986
        %v1021 = vunpack.c.l.b16 %v1000
        %v1022 = vunpack.c.l.b16 %v1014
        %v1023 = vpack.c.b16 %v1016, %v1015
        %v1024 = vpack.c.b16 %v1018, %v1017
        %v1025 = vpack.c.b16 %v1020, %v1019
        %v1026 = vpack.c.b16 %v1022, %v1021
        %1027 = vrot.lane.b32.xlu0 %v1023, 8
        %v1028 = vpop.permute.xlu0 %1027
        %1029 = vrot.lane.b32.xlu0 %v1024, 8
        %v1030 = vpop.permute.xlu0 %1029
        %1031 = vrot.lane.b32.xlu0 %v1025, 8
        %v1032 = vpop.permute.xlu0 %1031
        %1033 = vrot.lane.b32.xlu0 %v1026, 8
        %v1034 = vpop.permute.xlu0 %1033
        %vm1039 = vcmask 130112
        %1040 = vst.msk [vmem:[#allocation3] sm:$0xff] %vm1039, %v1028
        %1041 = vst.msk [vmem:[#allocation3 + $0x8] sm:$0xff] %vm1039, %v1030
        %1042 = vst.msk [vmem:[#allocation3 + $0x10] sm:$0xff] %vm1039, %v1032
        %1043 = vst.msk [vmem:[#allocation3 + $0x18] sm:$0xff] %vm1039, %v1034
        %v1044 = vld [vmem:[#allocation2] sm:$0xe]
        %v1045 = vld [vmem:[#allocation2 + $0x4] sm:$0x1]
        %v1046 = vld [vmem:[#allocation2 + $0x8] sm:$0xe]
        %v1047 = vld [vmem:[#allocation2 + $0xc] sm:$0x1]
        %v1048 = vld [vmem:[#allocation2 + $0x10] sm:$0xe]
        %v1049 = vld [vmem:[#allocation2 + $0x14] sm:$0x1]
        %v1050 = vld [vmem:[#allocation2 + $0x18] sm:$0xe]
        %v1051 = vld [vmem:[#allocation2 + $0x1c] sm:$0x1]
        %v1052 = vld [vmem:[#allocation2 + $0x20] sm:$0xe]
        %v1053 = vld [vmem:[#allocation2 + $0x24] sm:$0x1]
        %v1054 = vld [vmem:[#allocation2 + $0x28] sm:$0xe]
        %v1055 = vld [vmem:[#allocation2 + $0x2c] sm:$0x1]
        %v1056 = vld [vmem:[#allocation2 + $0x30] sm:$0xe]
        %v1057 = vld [vmem:[#allocation2 + $0x34] sm:$0x1]
        %v1058 = vld [vmem:[#allocation2 + $0x38] sm:$0xe]
        %v1059 = vld [vmem:[#allocation2 + $0x3c] sm:$0x1]
        %vm1076 = vcmask 1042432
        %vm1077 = vcmask 1046532
        %vm1078 = vmor %vm1076, %vm1077
        %v1079 = vrot.slane %v1044, 5
        %v1080 = vrot.slane %v1079, 4
        %v1081 = vrot.slane %v1045, 5
        %v1082 = vsel %vm1078, %v1080, %v1081
        %v1083 = vrot.slane %v1046, 5
        %v1084 = vrot.slane %v1083, 4
        %v1085 = vrot.slane %v1047, 5
        %v1086 = vsel %vm1078, %v1084, %v1085
        %v1087 = vrot.slane %v1048, 5
        %v1088 = vrot.slane %v1087, 4
        %v1089 = vrot.slane %v1049, 5
        %v1090 = vsel %vm1078, %v1088, %v1089
        %v1091 = vrot.slane %v1050, 5
        %v1092 = vrot.slane %v1091, 4
        %v1093 = vrot.slane %v1051, 5
        %v1094 = vsel %vm1078, %v1092, %v1093
        %v1095 = vrot.slane %v1052, 5
        %v1096 = vrot.slane %v1095, 4
        %v1097 = vrot.slane %v1053, 5
        %v1098 = vsel %vm1078, %v1096, %v1097
        %v1099 = vrot.slane %v1054, 5
        %v1100 = vrot.slane %v1099, 4
        %v1101 = vrot.slane %v1055, 5
        %v1102 = vsel %vm1078, %v1100, %v1101
        %v1103 = vrot.slane %v1056, 5
        %v1104 = vrot.slane %v1103, 4
        %v1105 = vrot.slane %v1057, 5
        %v1106 = vsel %vm1078, %v1104, %v1105
        %v1107 = vrot.slane %v1058, 5
        %v1108 = vrot.slane %v1107, 4
        %v1109 = vrot.slane %v1059, 5
        %v1110 = vsel %vm1078, %v1108, %v1109
        %v1111 = vunpack.c.l.b16 %v1082
        %v1112 = vunpack.c.l.b16 %v1086
        %v1113 = vunpack.c.l.b16 %v1090
        %v1114 = vunpack.c.l.b16 %v1094
        %v1115 = vunpack.c.l.b16 %v1098
        %v1116 = vunpack.c.l.b16 %v1102
        %v1117 = vunpack.c.l.b16 %v1106
        %v1118 = vunpack.c.l.b16 %v1110
        %v1119 = vpack.c.b16 %v1112, %v1111
        %v1120 = vpack.c.b16 %v1114, %v1113
        %v1121 = vpack.c.b16 %v1116, %v1115
        %v1122 = vpack.c.b16 %v1118, %v1117
        %1123 = vrot.lane.b32.xlu0 %v1119, 16
        %v1124 = vpop.permute.xlu0 %1123
        %1125 = vrot.lane.b32.xlu0 %v1120, 16
        %v1126 = vpop.permute.xlu0 %1125
        %1127 = vrot.lane.b32.xlu0 %v1121, 16
        %v1128 = vpop.permute.xlu0 %1127
        %1129 = vrot.lane.b32.xlu0 %v1122, 16
        %v1130 = vpop.permute.xlu0 %1129
        %vm1135 = vcmask 195712
        %1136 = vst.msk [vmem:[#allocation3] sm:$0xff] %vm1135, %v1124
        %1137 = vst.msk [vmem:[#allocation3 + $0x8] sm:$0xff] %vm1135, %v1126
        %1138 = vst.msk [vmem:[#allocation3 + $0x10] sm:$0xff] %vm1135, %v1128
        %1139 = vst.msk [vmem:[#allocation3 + $0x18] sm:$0xff] %vm1135, %v1130
        %v1140 = vld [vmem:[%s796] sm:$0xf]
        %v1141 = vld [vmem:[%s796 + $0x8] sm:$0xf]
        %v1142 = vld [vmem:[%s796 + $0x10] sm:$0xf]
        %v1143 = vld [vmem:[%s796 + $0x18] sm:$0xf]
        %v1144 = vld [vmem:[%s796 + $0x20] sm:$0xf]
        %v1145 = vld [vmem:[%s796 + $0x28] sm:$0xf]
        %v1146 = vld [vmem:[%s796 + $0x30] sm:$0xf]
        %v1147 = vld [vmem:[%s796 + $0x38] sm:$0xf]
        %v1156 = vunpack.c.l.b16 %v1140
        %v1157 = vunpack.c.l.b16 %v1141
        %v1158 = vunpack.c.l.b16 %v1142
        %v1159 = vunpack.c.l.b16 %v1143
        %v1160 = vunpack.c.l.b16 %v1144
        %v1161 = vunpack.c.l.b16 %v1145
        %v1162 = vunpack.c.l.b16 %v1146
        %v1163 = vunpack.c.l.b16 %v1147
        %v1164 = vpack.c.b16 %v1157, %v1156
        %v1165 = vpack.c.b16 %v1159, %v1158
        %v1166 = vpack.c.b16 %v1161, %v1160
        %v1167 = vpack.c.b16 %v1163, %v1162
        %1168 = vrot.lane.b32.xlu0 %v1164, 24
        %v1169 = vpop.permute.xlu0 %1168
        %1170 = vrot.lane.b32.xlu0 %v1165, 24
        %v1171 = vpop.permute.xlu0 %1170
        %1172 = vrot.lane.b32.xlu0 %v1166, 24
        %v1173 = vpop.permute.xlu0 %1172
        %1174 = vrot.lane.b32.xlu0 %v1167, 24
        %v1175 = vpop.permute.xlu0 %1174
        %vm1180 = vcmask 261312
        %1181 = vst.msk [vmem:[#allocation3] sm:$0xff] %vm1180, %v1169
        %1182 = vst.msk [vmem:[#allocation3 + $0x8] sm:$0xff] %vm1180, %v1171
        %1183 = vst.msk [vmem:[#allocation3 + $0x10] sm:$0xff] %vm1180, %v1173
        %1184 = vst.msk [vmem:[#allocation3 + $0x18] sm:$0xff] %vm1180, %v1175
        %v1185 = vld [vmem:[%s796] sm:$0xf]
        %v1186 = vld [vmem:[%s796 + $0x4] sm:$0x1]
        %v1187 = vld [vmem:[%s796 + $0x8] sm:$0xf]
        %v1188 = vld [vmem:[%s796 + $0xc] sm:$0x1]
        %v1189 = vld [vmem:[%s796 + $0x10] sm:$0xf]
        %v1190 = vld [vmem:[%s796 + $0x14] sm:$0x1]
        %v1191 = vld [vmem:[%s796 + $0x18] sm:$0xf]
        %v1192 = vld [vmem:[%s796 + $0x1c] sm:$0x1]
        %v1193 = vld [vmem:[%s796 + $0x20] sm:$0xf]
        %v1194 = vld [vmem:[%s796 + $0x24] sm:$0x1]
        %v1195 = vld [vmem:[%s796 + $0x28] sm:$0xf]
        %v1196 = vld [vmem:[%s796 + $0x2c] sm:$0x1]
        %v1197 = vld [vmem:[%s796 + $0x30] sm:$0xf]
        %v1198 = vld [vmem:[%s796 + $0x34] sm:$0x1]
        %v1199 = vld [vmem:[%s796 + $0x38] sm:$0xf]
        %v1200 = vld [vmem:[%s796 + $0x3c] sm:$0x1]
        %v1202 = vshrl.u32 %v1185, 16
        %v1204 = vrot.slane %v1202, 4
        %v1205 = vshll.u32 %v1185, 16
        %v1207 = vrot.slane %v1205, 5
        %v1208 = vor.u32 %v1204, %v1207
        %v1209 = vrot.slane %v1208, 4
        %v1211 = vshll.u32 %v1186, 16
        %v1213 = vrot.slane %v1211, 5
        %v1214 = vsel %vm902, %v1209, %v1213
        %v1216 = vshrl.u32 %v1187, 16
        %v1218 = vrot.slane %v1216, 4
        %v1219 = vshll.u32 %v1187, 16
        %v1221 = vrot.slane %v1219, 5
        %v1222 = vor.u32 %v1218, %v1221
        %v1223 = vrot.slane %v1222, 4
        %v1225 = vshll.u32 %v1188, 16
        %v1227 = vrot.slane %v1225, 5
        %v1228 = vsel %vm902, %v1223, %v1227
        %v1230 = vshrl.u32 %v1189, 16
        %v1232 = vrot.slane %v1230, 4
        %v1233 = vshll.u32 %v1189, 16
        %v1235 = vrot.slane %v1233, 5
        %v1236 = vor.u32 %v1232, %v1235
        %v1237 = vrot.slane %v1236, 4
        %v1239 = vshll.u32 %v1190, 16
        %v1241 = vrot.slane %v1239, 5
        %v1242 = vsel %vm902, %v1237, %v1241
        %v1244 = vshrl.u32 %v1191, 16
        %v1246 = vrot.slane %v1244, 4
        %v1247 = vshll.u32 %v1191, 16
        %v1249 = vrot.slane %v1247, 5
        %v1250 = vor.u32 %v1246, %v1249
        %v1251 = vrot.slane %v1250, 4
        %v1253 = vshll.u32 %v1192, 16
        %v1255 = vrot.slane %v1253, 5
        %v1256 = vsel %vm902, %v1251, %v1255
        %v1258 = vshrl.u32 %v1193, 16
        %v1260 = vrot.slane %v1258, 4
        %v1261 = vshll.u32 %v1193, 16
        %v1263 = vrot.slane %v1261, 5
        %v1264 = vor.u32 %v1260, %v1263
        %v1265 = vrot.slane %v1264, 4
        %v1267 = vshll.u32 %v1194, 16
        %v1269 = vrot.slane %v1267, 5
        %v1270 = vsel %vm902, %v1265, %v1269
        %v1272 = vshrl.u32 %v1195, 16
        %v1274 = vrot.slane %v1272, 4
        %v1275 = vshll.u32 %v1195, 16
        %v1277 = vrot.slane %v1275, 5
        %v1278 = vor.u32 %v1274, %v1277
        %v1279 = vrot.slane %v1278, 4
        %v1281 = vshll.u32 %v1196, 16
        %v1283 = vrot.slane %v1281, 5
        %v1284 = vsel %vm902, %v1279, %v1283
        %v1286 = vshrl.u32 %v1197, 16
        %v1288 = vrot.slane %v1286, 4
        %v1289 = vshll.u32 %v1197, 16
        %v1291 = vrot.slane %v1289, 5
        %v1292 = vor.u32 %v1288, %v1291
        %v1293 = vrot.slane %v1292, 4
        %v1295 = vshll.u32 %v1198, 16
        %v1297 = vrot.slane %v1295, 5
        %v1298 = vsel %vm902, %v1293, %v1297
        %v1300 = vshrl.u32 %v1199, 16
        %v1302 = vrot.slane %v1300, 4
        %v1303 = vshll.u32 %v1199, 16
        %v1305 = vrot.slane %v1303, 5
        %v1306 = vor.u32 %v1302, %v1305
        %v1307 = vrot.slane %v1306, 4
        %v1309 = vshll.u32 %v1200, 16
        %v1311 = vrot.slane %v1309, 5
        %v1312 = vsel %vm902, %v1307, %v1311
        %v1313 = vunpack.c.l.b16 %v1214
        %v1314 = vunpack.c.l.b16 %v1228
        %v1315 = vunpack.c.l.b16 %v1242
        %v1316 = vunpack.c.l.b16 %v1256
        %v1317 = vunpack.c.l.b16 %v1270
        %v1318 = vunpack.c.l.b16 %v1284
        %v1319 = vunpack.c.l.b16 %v1298
        %v1320 = vunpack.c.l.b16 %v1312
        %v1321 = vpack.c.b16 %v1314, %v1313
        %v1322 = vpack.c.b16 %v1316, %v1315
        %v1323 = vpack.c.b16 %v1318, %v1317
        %v1324 = vpack.c.b16 %v1320, %v1319
        %1325 = vrot.lane.b32.xlu0 %v1321, 32
        %v1326 = vpop.permute.xlu0 %1325
        %1327 = vrot.lane.b32.xlu0 %v1322, 32
        %v1328 = vpop.permute.xlu0 %1327
        %1329 = vrot.lane.b32.xlu0 %v1323, 32
        %v1330 = vpop.permute.xlu0 %1329
        %1331 = vrot.lane.b32.xlu0 %v1324, 32
        %v1332 = vpop.permute.xlu0 %1331
        %vm1337 = vcmask 326912
        %1338 = vst.msk [vmem:[#allocation3] sm:$0xff] %vm1337, %v1326
        %1339 = vst.msk [vmem:[#allocation3 + $0x8] sm:$0xff] %vm1337, %v1328
        %1340 = vst.msk [vmem:[#allocation3 + $0x10] sm:$0xff] %vm1337, %v1330
        %1341 = vst.msk [vmem:[#allocation3 + $0x18] sm:$0xff] %vm1337, %v1332
        %v1342 = vld [vmem:[%s796] sm:$0xe]
        %v1343 = vld [vmem:[%s796 + $0x4] sm:$0x1]
        %v1344 = vld [vmem:[%s796 + $0x8] sm:$0xe]
        %v1345 = vld [vmem:[%s796 + $0xc] sm:$0x1]
        %v1346 = vld [vmem:[%s796 + $0x10] sm:$0xe]
        %v1347 = vld [vmem:[%s796 + $0x14] sm:$0x1]
        %v1348 = vld [vmem:[%s796 + $0x18] sm:$0xe]
        %v1349 = vld [vmem:[%s796 + $0x1c] sm:$0x1]
        %v1350 = vld [vmem:[%s796 + $0x20] sm:$0xe]
        %v1351 = vld [vmem:[%s796 + $0x24] sm:$0x1]
        %v1352 = vld [vmem:[%s796 + $0x28] sm:$0xe]
        %v1353 = vld [vmem:[%s796 + $0x2c] sm:$0x1]
        %v1354 = vld [vmem:[%s796 + $0x30] sm:$0xe]
        %v1355 = vld [vmem:[%s796 + $0x34] sm:$0x1]
        %v1356 = vld [vmem:[%s796 + $0x38] sm:$0xe]
        %v1357 = vld [vmem:[%s796 + $0x3c] sm:$0x1]
        %v1374 = vrot.slane %v1342, 5
        %v1375 = vrot.slane %v1374, 4
        %v1376 = vrot.slane %v1343, 5
        %v1377 = vsel %vm1078, %v1375, %v1376
        %v1378 = vrot.slane %v1344, 5
        %v1379 = vrot.slane %v1378, 4
        %v1380 = vrot.slane %v1345, 5
        %v1381 = vsel %vm1078, %v1379, %v1380
        %v1382 = vrot.slane %v1346, 5
        %v1383 = vrot.slane %v1382, 4
        %v1384 = vrot.slane %v1347, 5
        %v1385 = vsel %vm1078, %v1383, %v1384
        %v1386 = vrot.slane %v1348, 5
        %v1387 = vrot.slane %v1386, 4
        %v1388 = vrot.slane %v1349, 5
        %v1389 = vsel %vm1078, %v1387, %v1388
        %v1390 = vrot.slane %v1350, 5
        %v1391 = vrot.slane %v1390, 4
        %v1392 = vrot.slane %v1351, 5
        %v1393 = vsel %vm1078, %v1391, %v1392
        %v1394 = vrot.slane %v1352, 5
        %v1395 = vrot.slane %v1394, 4
        %v1396 = vrot.slane %v1353, 5
        %v1397 = vsel %vm1078, %v1395, %v1396
        %v1398 = vrot.slane %v1354, 5
        %v1399 = vrot.slane %v1398, 4
        %v1400 = vrot.slane %v1355, 5
        %v1401 = vsel %vm1078, %v1399, %v1400
        %v1402 = vrot.slane %v1356, 5
        %v1403 = vrot.slane %v1402, 4
        %v1404 = vrot.slane %v1357, 5
        %v1405 = vsel %vm1078, %v1403, %v1404
        %v1406 = vunpack.c.l.b16 %v1377
        %v1407 = vunpack.c.l.b16 %v1381
        %v1408 = vunpack.c.l.b16 %v1385
        %v1409 = vunpack.c.l.b16 %v1389
        %v1410 = vunpack.c.l.b16 %v1393
        %v1411 = vunpack.c.l.b16 %v1397
        %v1412 = vunpack.c.l.b16 %v1401
        %v1413 = vunpack.c.l.b16 %v1405
        %v1414 = vpack.c.b16 %v1407, %v1406
        %v1415 = vpack.c.b16 %v1409, %v1408
        %v1416 = vpack.c.b16 %v1411, %v1410
        %v1417 = vpack.c.b16 %v1413, %v1412
        %1418 = vrot.lane.b32.xlu0 %v1414, 40
        %v1419 = vpop.permute.xlu0 %1418
        %1420 = vrot.lane.b32.xlu0 %v1415, 40
        %v1421 = vpop.permute.xlu0 %1420
        %1422 = vrot.lane.b32.xlu0 %v1416, 40
        %v1423 = vpop.permute.xlu0 %1422
        %1424 = vrot.lane.b32.xlu0 %v1417, 40
        %v1425 = vpop.permute.xlu0 %1424
        %vm1430 = vcmask 392512
        %1431 = vst.msk [vmem:[#allocation3] sm:$0xff] %vm1430, %v1419
        %1432 = vst.msk [vmem:[#allocation3 + $0x8] sm:$0xff] %vm1430, %v1421
        %1433 = vst.msk [vmem:[#allocation3 + $0x10] sm:$0xff] %vm1430, %v1423
        %1434 = vst.msk [vmem:[#allocation3 + $0x18] sm:$0xff] %vm1430, %v1425
        %s1435 = scalar_lea.vmem [#allocation2], 16
        %v1436 = vld [vmem:[%s1435] sm:$0xf]
        %v1437 = vld [vmem:[%s1435 + $0x8] sm:$0xf]
        %v1438 = vld [vmem:[%s1435 + $0x10] sm:$0xf]
        %v1439 = vld [vmem:[%s1435 + $0x18] sm:$0xf]
        %v1440 = vld [vmem:[%s1435 + $0x20] sm:$0xf]
        %v1441 = vld [vmem:[%s1435 + $0x28] sm:$0xf]
        %v1442 = vld [vmem:[%s1435 + $0x30] sm:$0xf]
        %v1443 = vld [vmem:[%s1435 + $0x38] sm:$0xf]
        %v1452 = vunpack.c.l.b16 %v1436
        %v1453 = vunpack.c.l.b16 %v1437
        %v1454 = vunpack.c.l.b16 %v1438
        %v1455 = vunpack.c.l.b16 %v1439
        %v1456 = vunpack.c.l.b16 %v1440
        %v1457 = vunpack.c.l.b16 %v1441
        %v1458 = vunpack.c.l.b16 %v1442
        %v1459 = vunpack.c.l.b16 %v1443
        %v1460 = vpack.c.b16 %v1453, %v1452
        %v1461 = vpack.c.b16 %v1455, %v1454
        %v1462 = vpack.c.b16 %v1457, %v1456
        %v1463 = vpack.c.b16 %v1459, %v1458
        %1464 = vrot.lane.b32.xlu0 %v1460, 48
        %v1465 = vpop.permute.xlu0 %1464
        %1466 = vrot.lane.b32.xlu0 %v1461, 48
        %v1467 = vpop.permute.xlu0 %1466
        %1468 = vrot.lane.b32.xlu0 %v1462, 48
        %v1469 = vpop.permute.xlu0 %1468
        %1470 = vrot.lane.b32.xlu0 %v1463, 48
        %v1471 = vpop.permute.xlu0 %1470
        %vm1476 = vcmask 458112
        %1477 = vst.msk [vmem:[#allocation3] sm:$0xff] %vm1476, %v1465
        %1478 = vst.msk [vmem:[#allocation3 + $0x8] sm:$0xff] %vm1476, %v1467
        %1479 = vst.msk [vmem:[#allocation3 + $0x10] sm:$0xff] %vm1476, %v1469
        %1480 = vst.msk [vmem:[#allocation3 + $0x18] sm:$0xff] %vm1476, %v1471
        %v1481 = vld [vmem:[%s1435] sm:$0xf]
        %v1482 = vld [vmem:[%s1435 + $0x4] sm:$0x1]
        %v1483 = vld [vmem:[%s1435 + $0x8] sm:$0xf]
        %v1484 = vld [vmem:[%s1435 + $0xc] sm:$0x1]
        %v1485 = vld [vmem:[%s1435 + $0x10] sm:$0xf]
        %v1486 = vld [vmem:[%s1435 + $0x14] sm:$0x1]
        %v1487 = vld [vmem:[%s1435 + $0x18] sm:$0xf]
        %v1488 = vld [vmem:[%s1435 + $0x1c] sm:$0x1]
        %v1489 = vld [vmem:[%s1435 + $0x20] sm:$0xf]
        %v1490 = vld [vmem:[%s1435 + $0x24] sm:$0x1]
        %v1491 = vld [vmem:[%s1435 + $0x28] sm:$0xf]
        %v1492 = vld [vmem:[%s1435 + $0x2c] sm:$0x1]
        %v1493 = vld [vmem:[%s1435 + $0x30] sm:$0xf]
        %v1494 = vld [vmem:[%s1435 + $0x34] sm:$0x1]
        %v1495 = vld [vmem:[%s1435 + $0x38] sm:$0xf]
        %v1496 = vld [vmem:[%s1435 + $0x3c] sm:$0x1]
        %v1498 = vshrl.u32 %v1481, 16
        %v1500 = vrot.slane %v1498, 4
        %v1501 = vshll.u32 %v1481, 16
        %v1503 = vrot.slane %v1501, 5
        %v1504 = vor.u32 %v1500, %v1503
        %v1505 = vrot.slane %v1504, 4
        %v1507 = vshll.u32 %v1482, 16
        %v1509 = vrot.slane %v1507, 5
        %v1510 = vsel %vm902, %v1505, %v1509
        %v1512 = vshrl.u32 %v1483, 16
        %v1514 = vrot.slane %v1512, 4
        %v1515 = vshll.u32 %v1483, 16
        %v1517 = vrot.slane %v1515, 5
        %v1518 = vor.u32 %v1514, %v1517
        %v1519 = vrot.slane %v1518, 4
        %v1521 = vshll.u32 %v1484, 16
        %v1523 = vrot.slane %v1521, 5
        %v1524 = vsel %vm902, %v1519, %v1523
        %v1526 = vshrl.u32 %v1485, 16
        %v1528 = vrot.slane %v1526, 4
        %v1529 = vshll.u32 %v1485, 16
        %v1531 = vrot.slane %v1529, 5
        %v1532 = vor.u32 %v1528, %v1531
        %v1533 = vrot.slane %v1532, 4
        %v1535 = vshll.u32 %v1486, 16
        %v1537 = vrot.slane %v1535, 5
        %v1538 = vsel %vm902, %v1533, %v1537
        %v1540 = vshrl.u32 %v1487, 16
        %v1542 = vrot.slane %v1540, 4
        %v1543 = vshll.u32 %v1487, 16
        %v1545 = vrot.slane %v1543, 5
        %v1546 = vor.u32 %v1542, %v1545
        %v1547 = vrot.slane %v1546, 4
        %v1549 = vshll.u32 %v1488, 16
        %v1551 = vrot.slane %v1549, 5
        %v1552 = vsel %vm902, %v1547, %v1551
        %v1554 = vshrl.u32 %v1489, 16
        %v1556 = vrot.slane %v1554, 4
        %v1557 = vshll.u32 %v1489, 16
        %v1559 = vrot.slane %v1557, 5
        %v1560 = vor.u32 %v1556, %v1559
        %v1561 = vrot.slane %v1560, 4
        %v1563 = vshll.u32 %v1490, 16
        %v1565 = vrot.slane %v1563, 5
        %v1566 = vsel %vm902, %v1561, %v1565
        %v1568 = vshrl.u32 %v1491, 16
        %v1570 = vrot.slane %v1568, 4
        %v1571 = vshll.u32 %v1491, 16
        %v1573 = vrot.slane %v1571, 5
        %v1574 = vor.u32 %v1570, %v1573
        %v1575 = vrot.slane %v1574, 4
        %v1577 = vshll.u32 %v1492, 16
        %v1579 = vrot.slane %v1577, 5
        %v1580 = vsel %vm902, %v1575, %v1579
        %v1582 = vshrl.u32 %v1493, 16
        %v1584 = vrot.slane %v1582, 4
        %v1585 = vshll.u32 %v1493, 16
        %v1587 = vrot.slane %v1585, 5
        %v1588 = vor.u32 %v1584, %v1587
        %v1589 = vrot.slane %v1588, 4
        %v1591 = vshll.u32 %v1494, 16
        %v1593 = vrot.slane %v1591, 5
        %v1594 = vsel %vm902, %v1589, %v1593
        %v1596 = vshrl.u32 %v1495, 16
        %v1598 = vrot.slane %v1596, 4
        %v1599 = vshll.u32 %v1495, 16
        %v1601 = vrot.slane %v1599, 5
        %v1602 = vor.u32 %v1598, %v1601
        %v1603 = vrot.slane %v1602, 4
        %v1605 = vshll.u32 %v1496, 16
        %v1607 = vrot.slane %v1605, 5
        %v1608 = vsel %vm902, %v1603, %v1607
        %v1609 = vunpack.c.l.b16 %v1510
        %v1610 = vunpack.c.l.b16 %v1524
        %v1611 = vunpack.c.l.b16 %v1538
        %v1612 = vunpack.c.l.b16 %v1552
        %v1613 = vunpack.c.l.b16 %v1566
        %v1614 = vunpack.c.l.b16 %v1580
        %v1615 = vunpack.c.l.b16 %v1594
        %v1616 = vunpack.c.l.b16 %v1608
        %v1617 = vpack.c.b16 %v1610, %v1609
        %v1618 = vpack.c.b16 %v1612, %v1611
        %v1619 = vpack.c.b16 %v1614, %v1613
        %v1620 = vpack.c.b16 %v1616, %v1615
        %1621 = vrot.lane.b32.xlu0 %v1617, 56
        %v1622 = vpop.permute.xlu0 %1621
        %1623 = vrot.lane.b32.xlu0 %v1618, 56
        %v1624 = vpop.permute.xlu0 %1623
        %1625 = vrot.lane.b32.xlu0 %v1619, 56
        %v1626 = vpop.permute.xlu0 %1625
        %1627 = vrot.lane.b32.xlu0 %v1620, 56
        %v1628 = vpop.permute.xlu0 %1627
        %vm1633 = vcmask 523712
        %1634 = vst.msk [vmem:[#allocation3] sm:$0xff] %vm1633, %v1622
        %1635 = vst.msk [vmem:[#allocation3 + $0x8] sm:$0xff] %vm1633, %v1624
        %1636 = vst.msk [vmem:[#allocation3 + $0x10] sm:$0xff] %vm1633, %v1626
        %1637 = vst.msk [vmem:[#allocation3 + $0x18] sm:$0xff] %vm1633, %v1628
        %v1638 = vld [vmem:[%s1435] sm:$0xe]
        %v1639 = vld [vmem:[%s1435 + $0x4] sm:$0x1]
        %v1640 = vld [vmem:[%s1435 + $0x8] sm:$0xe]
        %v1641 = vld [vmem:[%s1435 + $0xc] sm:$0x1]
        %v1642 = vld [vmem:[%s1435 + $0x10] sm:$0xe]
        %v1643 = vld [vmem:[%s1435 + $0x14] sm:$0x1]
        %v1644 = vld [vmem:[%s1435 + $0x18] sm:$0xe]
        %v1645 = vld [vmem:[%s1435 + $0x1c] sm:$0x1]
        %v1646 = vld [vmem:[%s1435 + $0x20] sm:$0xe]
        %v1647 = vld [vmem:[%s1435 + $0x24] sm:$0x1]
        %v1648 = vld [vmem:[%s1435 + $0x28] sm:$0xe]
        %v1649 = vld [vmem:[%s1435 + $0x2c] sm:$0x1]
        %v1650 = vld [vmem:[%s1435 + $0x30] sm:$0xe]
        %v1651 = vld [vmem:[%s1435 + $0x34] sm:$0x1]
        %v1652 = vld [vmem:[%s1435 + $0x38] sm:$0xe]
        %v1653 = vld [vmem:[%s1435 + $0x3c] sm:$0x1]
        %v1670 = vrot.slane %v1638, 5
        %v1671 = vrot.slane %v1670, 4
        %v1672 = vrot.slane %v1639, 5
        %v1673 = vsel %vm1078, %v1671, %v1672
        %v1674 = vrot.slane %v1640, 5
        %v1675 = vrot.slane %v1674, 4
        %v1676 = vrot.slane %v1641, 5
        %v1677 = vsel %vm1078, %v1675, %v1676
        %v1678 = vrot.slane %v1642, 5
        %v1679 = vrot.slane %v1678, 4
        %v1680 = vrot.slane %v1643, 5
        %v1681 = vsel %vm1078, %v1679, %v1680
        %v1682 = vrot.slane %v1644, 5
        %v1683 = vrot.slane %v1682, 4
        %v1684 = vrot.slane %v1645, 5
        %v1685 = vsel %vm1078, %v1683, %v1684
        %v1686 = vrot.slane %v1646, 5
        %v1687 = vrot.slane %v1686, 4
        %v1688 = vrot.slane %v1647, 5
        %v1689 = vsel %vm1078, %v1687, %v1688
        %v1690 = vrot.slane %v1648, 5
        %v1691 = vrot.slane %v1690, 4
        %v1692 = vrot.slane %v1649, 5
        %v1693 = vsel %vm1078, %v1691, %v1692
        %v1694 = vrot.slane %v1650, 5
        %v1695 = vrot.slane %v1694, 4
        %v1696 = vrot.slane %v1651, 5
        %v1697 = vsel %vm1078, %v1695, %v1696
        %v1698 = vrot.slane %v1652, 5
        %v1699 = vrot.slane %v1698, 4
        %v1700 = vrot.slane %v1653, 5
        %v1701 = vsel %vm1078, %v1699, %v1700
        %v1702 = vunpack.c.l.b16 %v1673
        %v1703 = vunpack.c.l.b16 %v1677
        %v1704 = vunpack.c.l.b16 %v1681
        %v1705 = vunpack.c.l.b16 %v1685
        %v1706 = vunpack.c.l.b16 %v1689
        %v1707 = vunpack.c.l.b16 %v1693
        %v1708 = vunpack.c.l.b16 %v1697
        %v1709 = vunpack.c.l.b16 %v1701
        %v1710 = vpack.c.b16 %v1703, %v1702
        %v1711 = vpack.c.b16 %v1705, %v1704
        %v1712 = vpack.c.b16 %v1707, %v1706
        %v1713 = vpack.c.b16 %v1709, %v1708
        %1714 = vrot.lane.b32.xlu0 %v1710, 64
        %v1715 = vpop.permute.xlu0 %1714
        %1716 = vrot.lane.b32.xlu0 %v1711, 64
        %v1717 = vpop.permute.xlu0 %1716
        %1718 = vrot.lane.b32.xlu0 %v1712, 64
        %v1719 = vpop.permute.xlu0 %1718
        %1720 = vrot.lane.b32.xlu0 %v1713, 64
        %v1721 = vpop.permute.xlu0 %1720
        %vm1726 = vcmask 589312
        %1727 = vst.msk [vmem:[#allocation3] sm:$0xff] %vm1726, %v1715
        %1728 = vst.msk [vmem:[#allocation3 + $0x8] sm:$0xff] %vm1726, %v1717
        %1729 = vst.msk [vmem:[#allocation3 + $0x10] sm:$0xff] %vm1726, %v1719
        %1730 = vst.msk [vmem:[#allocation3 + $0x18] sm:$0xff] %vm1726, %v1721
        %v1731 = vld [vmem:[#allocation3] sm:$0xff]
        %v1732 = vld [vmem:[#allocation3 + $0x8] sm:$0xff]
        %v1733 = vld [vmem:[#allocation3 + $0x10] sm:$0xff]
        %v1734 = vld [vmem:[#allocation3 + $0x18] sm:$0xff]
        %v1735 = vld [vmem:[#allocation9] sm:$0xf]
        %v1736 = vld [vmem:[#allocation9 + $0x4] sm:$0xf]
        %v1737 = vld [vmem:[#allocation9 + $0x8] sm:$0xf]
        %v1738 = vld [vmem:[#allocation9 + $0xc] sm:$0xf]
        %v1739 = vld [vmem:[#allocation9 + $0x10] sm:$0xf]
        %v1740 = vld [vmem:[#allocation9 + $0x14] sm:$0xf]
        %v1741 = vld [vmem:[#allocation9 + $0x18] sm:$0xf]
        %v1742 = vld [vmem:[#allocation9 + $0x1c] sm:$0xf]
        %v1743 = vld [vmem:[#allocation9 + $0x20] sm:$0xf]
        %v1744 = vld [vmem:[#allocation13] sm:$0x1]
        %v1746 = vlaneseq
        %v1747 = vshrl.u32 %v1746, 7
        %v1748 = vsub.s32 0, %v1747
        %v1749 = vrot.slane %v1744, %v1748
        %v1760 = vunpack.c.l.b16 %v1735
        %v1761 = vunpack.c.l.b16 %v1736
        %v1762 = vunpack.c.l.b16 %v1737
        %v1763 = vunpack.c.l.b16 %v1738
        %v1764 = vunpack.c.l.b16 %v1739
        %v1765 = vunpack.c.l.b16 %v1740
        %v1766 = vunpack.c.l.b16 %v1741
        %v1767 = vunpack.c.l.b16 %v1742
        %v1768 = vunpack.c.l.b16 %v1743
        %v1769 = vpack.c.b16 %v1761, %v1760
        %v1770 = vpack.c.b16 %v1763, %v1762
        %v1771 = vpack.c.b16 %v1765, %v1764
        %v1772 = vpack.c.b16 %v1767, %v1766
        %v1773 = vpack.c.b16 %v1768, %v1768
        %vm1778 = vcmask 588800
        %v1780 = vsel %vm1778, %v1731, 0
        %v1783 = vsel %vm1778, %v1732, 0
        %v1786 = vsel %vm1778, %v1733, 0
        %v1789 = vsel %vm1778, %v1734, 0
        %vm1791 = vcmask 1043456
        %v1793 = vsel %vm1791, %v1773, 0
        %1795 = vmatprep.subr.bf16.mxu0 0
        %1796 = vmatpush1.bf16.msra.mxu0 %v1769
        %1797 = vmatprep.subr.bf16.mxu0 0
        %1798 = vmatpush1.bf16.msra.mxu0 %v1770
        %1799 = vmatprep.subr.bf16.mxu0 0
        %1800 = vmatpush1.bf16.msra.mxu0 %v1771
        %1801 = vmatprep.subr.bf16.mxu0 0
        %1802 = vmatpush1.bf16.msra.mxu0 %v1772
        %1803 = vmatprep.subr.bf16.mxu0 0
        %1804 = vmatpush1.bf16.msra.mxu0 %v1793
        %1805 = vmatprep.subr.bf16.mxu0 0
        %1806 = vmatpush1.bf16.msra.mxu0 0
        %1807 = vmatprep.subr.bf16.mxu0 0
        %1808 = vmatpush1.bf16.msra.mxu0 0
        %1809 = vmatprep.subr.bf16.mxu0 0
        %1810 = vmatpush1.bf16.msra.mxu0 0
        %1811 = vmatprep.subr.bf16.mxu0 0
        %1812 = vmatpush1.bf16.msra.mxu0 0
        %1813 = vmatprep.subr.bf16.mxu0 0
        %1814 = vmatpush1.bf16.msra.mxu0 0
        %1815 = vmatprep.subr.bf16.mxu0 0
        %1816 = vmatpush1.bf16.msra.mxu0 0
        %1817 = vmatprep.subr.bf16.mxu0 0
        %1818 = vmatpush1.bf16.msra.mxu0 0
        %1819 = vmatprep.subr.bf16.mxu0 0
        %1820 = vmatpush1.bf16.msra.mxu0 0
        %1821 = vmatprep.subr.bf16.mxu0 0
        %1822 = vmatpush1.bf16.msra.mxu0 0
        %1823 = vmatprep.subr.bf16.mxu0 0
        %1824 = vmatpush1.bf16.msra.mxu0 0
        %1825 = vmatprep.subr.bf16.mxu0 0
        %1826 = vmatpush1.bf16.msra.mxu0 0
        %1827 = vmatprep.mubr.bf16.mxu0 0
        %1828 = vmatmul.mubr.bf16.gmra.mrb[0].mxu0 %v1780
        %v1829 = vpop.f32.mrb[0].mxu0
        %v1830 = vadd.f32 %v1749, %v1829
        %v1831 = vpop.f32.mrb[0].mxu0
        %v1832 = vpop.f32.mrb[0].mxu0
        %v1833 = vadd.f32 %v1749, %v1832
        %v1834 = vpop.f32.mrb[0].mxu0
        %1835 = vmatprep.mubr.bf16.mxu0 0
        %1836 = vmatmul.mubr.bf16.gmra.mrb[0].mxu0 %v1783
        %v1837 = vpop.f32.mrb[0].mxu0
        %v1838 = vadd.f32 %v1749, %v1837
        %v1839 = vpop.f32.mrb[0].mxu0
        %v1840 = vpop.f32.mrb[0].mxu0
        %v1841 = vadd.f32 %v1749, %v1840
        %v1842 = vpop.f32.mrb[0].mxu0
        %1843 = vmatprep.mubr.bf16.mxu0 0
        %1844 = vmatmul.mubr.bf16.gmra.mrb[0].mxu0 %v1786
        %v1845 = vpop.f32.mrb[0].mxu0
        %v1846 = vadd.f32 %v1749, %v1845
        %v1847 = vpop.f32.mrb[0].mxu0
        %v1848 = vpop.f32.mrb[0].mxu0
        %v1849 = vadd.f32 %v1749, %v1848
        %v1850 = vpop.f32.mrb[0].mxu0
        %1851 = vmatprep.mubr.bf16.mxu0 0
        %1852 = vmatmul.mubr.bf16.gmra.mrb[0].mxu0 %v1789
        %v1853 = vpop.f32.mrb[0].mxu0
        %v1854 = vadd.f32 %v1749, %v1853
        %v1855 = vpop.f32.mrb[0].mxu0
        %v1856 = vpop.f32.mrb[0].mxu0
        %v1857 = vadd.f32 %v1749, %v1856
        %v1858 = vpop.f32.mrb[0].mxu0
        %1859 = vdwg.mxu0
        %v1860 = vmul.f32 %v1830, 0.01
        %v1861 = vmul.f32 %v1833, 0.01
        %v1862 = vmul.f32 %v1838, 0.01
        %v1863 = vmul.f32 %v1841, 0.01
        %v1864 = vmul.f32 %v1846, 0.01
        %v1865 = vmul.f32 %v1849, 0.01
        %v1866 = vmul.f32 %v1854, 0.01
        %v1867 = vmul.f32 %v1857, 0.01
        %v1868 = vmax.f32 %v1830, %v1860
        %v1869 = vmax.f32 %v1833, %v1861
        %v1870 = vmax.f32 %v1838, %v1862
        %v1871 = vmax.f32 %v1841, %v1863
        %v1872 = vmax.f32 %v1846, %v1864
        %v1873 = vmax.f32 %v1849, %v1865
        %v1874 = vmax.f32 %v1854, %v1866
        %v1875 = vmax.f32 %v1857, %v1867
        %v1876 = vpack.c.bf16 %v1869, %v1868
        %v1877 = vpack.c.bf16 %v1871, %v1870
        %v1878 = vpack.c.bf16 %v1873, %v1872
        %v1879 = vpack.c.bf16 %v1875, %v1874
        %v1880 = vld [vmem:[#allocation10] sm:$0xf]
        %v1881 = vld [vmem:[#allocation15] sm:$0x1]
        %v1883 = vlaneseq
        %v1884 = vshrl.u32 %v1883, 7
        %v1885 = vsub.s32 0, %v1884
        %v1886 = vrot.slane %v1881, %v1885
        %v1889 = vsel %vm879, %v1876, 0
        %v1892 = vsel %vm879, %v1877, 0
        %v1895 = vsel %vm879, %v1878, 0
        %v1898 = vsel %vm879, %v1879, 0
        %v1901 = vsel %vm1791, %v1880, 0
        %1903 = vmatprep.subr.bf16.mxu0 0
        %1904 = vmatpush1.bf16.msra.mxu0 %v1901
        %1905 = vmatprep.subr.bf16.mxu0 0
        %1906 = vmatpush1.bf16.msra.mxu0 0
        %1907 = vmatprep.subr.bf16.mxu0 0
        %1908 = vmatpush1.bf16.msra.mxu0 0
        %1909 = vmatprep.subr.bf16.mxu0 0
        %1910 = vmatpush1.bf16.msra.mxu0 0
        %1911 = vmatprep.subr.bf16.mxu0 0
        %1912 = vmatpush1.bf16.msra.mxu0 0
        %1913 = vmatprep.subr.bf16.mxu0 0
        %1914 = vmatpush1.bf16.msra.mxu0 0
        %1915 = vmatprep.subr.bf16.mxu0 0
        %1916 = vmatpush1.bf16.msra.mxu0 0
        %1917 = vmatprep.subr.bf16.mxu0 0
        %1918 = vmatpush1.bf16.msra.mxu0 0
        %1919 = vmatprep.subr.bf16.mxu0 0
        %1920 = vmatpush1.bf16.msra.mxu0 0
        %1921 = vmatprep.subr.bf16.mxu0 0
        %1922 = vmatpush1.bf16.msra.mxu0 0
        %1923 = vmatprep.subr.bf16.mxu0 0
        %1924 = vmatpush1.bf16.msra.mxu0 0
        %1925 = vmatprep.subr.bf16.mxu0 0
        %1926 = vmatpush1.bf16.msra.mxu0 0
        %1927 = vmatprep.subr.bf16.mxu0 0
        %1928 = vmatpush1.bf16.msra.mxu0 0
        %1929 = vmatprep.subr.bf16.mxu0 0
        %1930 = vmatpush1.bf16.msra.mxu0 0
        %1931 = vmatprep.subr.bf16.mxu0 0
        %1932 = vmatpush1.bf16.msra.mxu0 0
        %1933 = vmatprep.subr.bf16.mxu0 0
        %1934 = vmatpush1.bf16.msra.mxu0 0
        %1935 = vmatprep.mubr.bf16.mxu0 0
        %1936 = vmatmul.mubr.bf16.gmra.mrb[0].mxu0 %v1889
        %v1937 = vpop.f32.mrb[0].mxu0
        %v1938 = vadd.f32 %v1886, %v1937
        %v1939 = vpop.f32.mrb[0].mxu0
        %v1940 = vpop.f32.mrb[0].mxu0
        %v1941 = vadd.f32 %v1886, %v1940
        %v1942 = vpop.f32.mrb[0].mxu0
        %1943 = vmatprep.mubr.bf16.mxu0 0
        %1944 = vmatmul.mubr.bf16.gmra.mrb[0].mxu0 %v1892
        %v1945 = vpop.f32.mrb[0].mxu0
        %v1946 = vadd.f32 %v1886, %v1945
        %v1947 = vpop.f32.mrb[0].mxu0
        %v1948 = vpop.f32.mrb[0].mxu0
        %v1949 = vadd.f32 %v1886, %v1948
        %v1950 = vpop.f32.mrb[0].mxu0
        %1951 = vmatprep.mubr.bf16.mxu0 0
        %1952 = vmatmul.mubr.bf16.gmra.mrb[0].mxu0 %v1895
        %v1953 = vpop.f32.mrb[0].mxu0
        %v1954 = vadd.f32 %v1886, %v1953
        %v1955 = vpop.f32.mrb[0].mxu0
        %v1956 = vpop.f32.mrb[0].mxu0
        %v1957 = vadd.f32 %v1886, %v1956
        %v1958 = vpop.f32.mrb[0].mxu0
        %1959 = vmatprep.mubr.bf16.mxu0 0
        %1960 = vmatmul.mubr.bf16.gmra.mrb[0].mxu0 %v1898
        %v1961 = vpop.f32.mrb[0].mxu0
        %v1962 = vadd.f32 %v1886, %v1961
        %v1963 = vpop.f32.mrb[0].mxu0
        %v1964 = vpop.f32.mrb[0].mxu0
        %v1965 = vadd.f32 %v1886, %v1964
        %v1966 = vpop.f32.mrb[0].mxu0
        %1967 = vdwg.mxu0
        %v1968 = vld [vmem:[%s415] sm:$0xff]
        %v1969 = vld [vmem:[%s415 + $0x8] sm:$0xff]
        %v1970 = vld [vmem:[%s415 + $0x10] sm:$0xff]
        %v1971 = vld [vmem:[%s415 + $0x18] sm:$0xff]
        %v1972 = vld [vmem:[%s415 + $0x20] sm:$0xff]
        %v1973 = vld [vmem:[%s415 + $0x28] sm:$0xff]
        %v1974 = vld [vmem:[%s415 + $0x30] sm:$0xff]
        %v1975 = vld [vmem:[%s415 + $0x38] sm:$0xff]
        %v1976 = vadd.f32 %v1938, %v1968
        %v1977 = vadd.f32 %v1941, %v1969
        %v1978 = vadd.f32 %v1946, %v1970
        %v1979 = vadd.f32 %v1949, %v1971
        %v1980 = vadd.f32 %v1954, %v1972
        %v1981 = vadd.f32 %v1957, %v1973
        %v1982 = vadd.f32 %v1962, %v1974
        %v1983 = vadd.f32 %v1965, %v1975
        %v1984 = vmul.f32 %v1976, 0.01
        %v1985 = vmul.f32 %v1977, 0.01
        %v1986 = vmul.f32 %v1978, 0.01
        %v1987 = vmul.f32 %v1979, 0.01
        %v1988 = vmul.f32 %v1980, 0.01
        %v1989 = vmul.f32 %v1981, 0.01
        %v1990 = vmul.f32 %v1982, 0.01
        %v1991 = vmul.f32 %v1983, 0.01
        %v1992 = vmax.f32 %v1976, %v1984
        %v1993 = vmax.f32 %v1977, %v1985
        %v1994 = vmax.f32 %v1978, %v1986
        %v1995 = vmax.f32 %v1979, %v1987
        %v1996 = vmax.f32 %v1980, %v1988
        %v1997 = vmax.f32 %v1981, %v1989
        %v1998 = vmax.f32 %v1982, %v1990
        %v1999 = vmax.f32 %v1983, %v1991
        %2000 = vst.msk [vmem:[%s415] sm:$0xff] %vm546, %v1992
        %2001 = vst.msk [vmem:[%s415 + $0x8] sm:$0xff] %vm546, %v1993
        %2002 = vst.msk [vmem:[%s415 + $0x10] sm:$0xff] %vm546, %v1994
        %2003 = vst.msk [vmem:[%s415 + $0x18] sm:$0xff] %vm546, %v1995
        %2004 = vst.msk [vmem:[%s415 + $0x20] sm:$0xff] %vm546, %v1996
        %2005 = vst.msk [vmem:[%s415 + $0x28] sm:$0xff] %vm546, %v1997
        %2006 = vst.msk [vmem:[%s415 + $0x30] sm:$0xff] %vm546, %v1998
        %2007 = vst.msk [vmem:[%s415 + $0x38] sm:$0xff] %vm546, %v1999
        %s2008 = sand.u32 %s210, 1
        %s2009 = scalar_lea.sflag [#allocation6], %s2008
        %s2010 = sand.u32 %s210, 1
        %s2011 = smul.addr %s2010, 64
        %s2012 = scalar_lea.vmem [#allocation18], %s2011
        // Predicated region
        $region85: #{tpu_custom_call.1} parent=51 // pred_check
          %p2013 = pneg %p220
        $region86: #{tpu_custom_call.1} parent=51 // pred_check_branch
          %2015 = sbr.rel (%p2013) target = $region88
        $region87: #{tpu_custom_call.1} parent=51 // pred_region
          %s2017 = ssub.s32 1024, 1024
          %2018 = vsyncadd %s2009, %s2017
          %s2019 = smul.addr %s29, 8
          %s2020 = smul.addr %s2019, 128
          %s2021 = scalar_lea.hbm %s8, %s2020
          %s2022 = sshll.u32 %s2012, 4
          %s2023 = int_to_ptr.vmem [resolvable:$true] %s2022
          %2028 = dma.vmem_to_hbm [thread:$0]  %s2023, 1024, %s2021, %s2009, 128, 128, 8
        $region88: #{tpu_custom_call.1} parent=51 // pred_fallthru
          _
      $region52: #{tpu_custom_call.1} parent=5 // pred_fallthru
        _
      %p2029 = scmp.le.s32.totalorder 2, %s24
      // Predicated region
      $region89: #{tpu_custom_call.1} parent=5 // pred_check
        %p2030 = pneg %p2029
      $region90: #{tpu_custom_call.1} parent=5 // pred_check_branch
        %2032 = sbr.rel (%p2030) target = $region92
      $region91: #{tpu_custom_call.1} parent=5 // pred_region
        %s2033 = ssub.s32 %s24, 2
        // Predicated region
        $region93: #{tpu_custom_call.1} parent=91 // pred_check
          %p2034 = pneg %p226
        $region94: #{tpu_custom_call.1} parent=91 // pred_check_branch
          %2036 = sbr.rel (%p2034) target = $region96
        $region95: #{tpu_custom_call.1} parent=91 // pred_region
          %s2037 = sand.u32 %s211, 1
          %s2038 = scalar_lea.sflag [#allocation6], %s2037
          %s2039 = sand.u32 %s211, 1
          %s2040 = smul.addr %s2039, 64
          %s2041 = scalar_lea.vmem [#allocation18], %s2040
          %2042 = dma.done %s2038, 1024
        $region96: #{tpu_custom_call.1} parent=91 // pred_fallthru
          _
      $region92: #{tpu_custom_call.1} parent=5 // pred_fallthru
        _
    $region6: #{tpu_custom_call.1} parent=1 // loop_footer
      %s28 = sadd.s32 1, %s24
    $region7: #{tpu_custom_call.1} parent=1 // loop_footer_branch
      %23 = sbr.rel target = $region3
    $region8: #{tpu_custom_call.1} parent=1 // loop_exit
      _
    %2043 = vsyncpa [#allocation5], 1
    %s2044 = scalar_lea.sflag [#allocation5], 1
    %2045 = vsyncpa %s2044, 1
    %2046 = vsyncpa [#allocation8], 1
    %2047 = vsyncpa [#allocation11], 1
    %2048 = vsyncpa [#allocation14], 1
    %2049 = vsyncpa [#allocation17], 1
    %2050 = vsyncpa [#allocation6], 1
    %s2051 = scalar_lea.sflag [#allocation6], 1
    %2052 = vsyncpa %s2051, 1

</llo_original>
